<compile_context>
chip_gen: v7x
topology: tpu7x:2x2x1
jax: 0.10.0
libtpu: 0.0.40
codegen_flags: <defaults>
</compile_context>

<pallas_src>
import jax
import jax.numpy as jnp
from jax.experimental import pallas as pl
from jax.experimental.pallas import tpu as pltpu


def _round_up(v, m):
    return (v + m - 1) // m * m


def _pad_gate_lanes(w, H, Hp):
    """Pad each of the 4 PyTorch-ordered (i,f,g,o) gate blocks on the last axis
    from width H to width Hp with zeros, so every gate starts on a 128-lane
    boundary inside the kernel."""
    if Hp == H:
        return w
    lead = w.shape[:-1]
    w4 = w.reshape(lead + (4, H))
    w4 = jnp.pad(w4, [(0, 0)] * len(lead) + [(0, 0), (0, Hp - H)])
    return w4.reshape(lead + (4 * Hp,))


def _lstm_recurrence_kernel(gx_ref, whh_ref, y_ref, h_ref, c_ref):
    """One grid step == one chunk of timesteps; recurrence via fori_loop.

    gx_ref : (TC, B, 4*Hp) f32  precomputed x@W_ih^T + bias (gate-lane padded)
    whh_ref: (Hp, 4*Hp)    f32  W_hh^T (gate-lane + row padded), constant
                                index map => fetched once, VMEM-resident
    y_ref  : (TC, B, Hp)        per-step hidden outputs for this chunk
    h_ref  : (B, Hp)       f32  carried hidden state == final h_n
    c_ref  : (B, Hp)       f32  carried cell   state == final c_n
    """
    @pl.when(pl.program_id(0) == 0)
    def _():
        h_ref[...] = jnp.zeros_like(h_ref)
        c_ref[...] = jnp.zeros_like(c_ref)

    Hp = h_ref.shape[-1]
    tc = gx_ref.shape[0]
    # Hoist the resident weight read out of the time loop.
    whh = whh_ref[...]

    def step(tt, carry):
        h_prev = h_ref[...]
        c_prev = c_ref[...]
        # Only the recurrent matmul remains on the serial critical path.
        gates = gx_ref[tt] + jnp.dot(h_prev, whh,
                                     preferred_element_type=jnp.float32)
        # PyTorch gate order: i, f, g, o.  sigmoid via tanh => EUP slot.
        i_g = 0.5 * jnp.tanh(0.5 * gates[:, 0 * Hp:1 * Hp]) + 0.5
        f_g = 0.5 * jnp.tanh(0.5 * gates[:, 1 * Hp:2 * Hp]) + 0.5
        g_g = jnp.tanh(gates[:, 2 * Hp:3 * Hp])
        o_g = 0.5 * jnp.tanh(0.5 * gates[:, 3 * Hp:4 * Hp]) + 0.5

        c_new = f_g * c_prev + i_g * g_g
        h_new = o_g * jnp.tanh(c_new)

        c_ref[...] = c_new
        h_ref[...] = h_new
        y_ref[tt] = h_new.astype(y_ref.dtype)
        return carry

    jax.lax.fori_loop(0, tc, step, 0, unroll=tc if tc <= 16 else 8)


def encoder_forward(x, w_ih, w_hh, b_ih, b_hh, *, time_chunk=None):
    """x: (B, T, D). Returns (output (B,T,H), (h_n (1,B,H), c_n (1,B,H)))."""
    B, T, D = x.shape
    H = w_hh.shape[1]
    Hp = _round_up(H, 128)          # lane-dense gate / state width
    G = 4 * Hp
    f32 = jnp.float32

    # ---- Gate-lane-padded parameters -------------------------------------
    wih_p = _pad_gate_lanes(jnp.transpose(w_ih).astype(f32), H, Hp)      # (D, 4Hp)
    whh_p = _pad_gate_lanes(jnp.transpose(w_hh).astype(f32), H, Hp)      # (H, 4Hp)
    whh_p = jnp.pad(whh_p, [(0, Hp - H), (0, 0)])                        # (Hp, 4Hp)
    bias_p = _pad_gate_lanes((b_ih + b_hh).astype(f32)[None, :], H, Hp)  # (1, 4Hp)

    # ---- Hoisted input projection: one big MXU-friendly matmul -----------
    # (B*T, D) @ (D, 4Hp); the (B,T)->(T,B) reordering is folded in here so x
    # itself is never transposed through HBM.
    gx = jnp.dot(x.reshape(B * T, D).astype(f32), wih_p,
                 precision=jax.lax.Precision.HIGHEST) + bias_p
    gx = jnp.transpose(gx.reshape(B, T, G), (1, 0, 2))                   # (T, B, 4Hp)

    # ---- Pick a time chunk that fits comfortably in VMEM -----------------
    if time_chunk is None:
        per_t_bytes = (B * G + B * Hp) * 4 * 2   # gx + y blocks, double-buffered
        budget = 4 << 20
        time_chunk = 1
        for cand in range(1, T + 1):
            if T % cand == 0 and cand * per_t_bytes <= budget:
                time_chunk = cand
    assert T % time_chunk == 0

    y, hn, cn = pl.pallas_call(
        _lstm_recurrence_kernel,
        out_shape=(
            jax.ShapeDtypeStruct((T, B, Hp), x.dtype),
            jax.ShapeDtypeStruct((B, Hp), f32),   # carried state stays f32
            jax.ShapeDtypeStruct((B, Hp), f32),
        ),
        grid_spec=pltpu.PrefetchScalarGridSpec(
            num_scalar_prefetch=0,
            grid=(T // time_chunk,),
            in_specs=[
                pl.BlockSpec((time_chunk, B, G), lambda i: (i, 0, 0)),
                pl.BlockSpec((Hp, G), lambda i: (0, 0)),   # resident weights
            ],
            out_specs=[
                pl.BlockSpec((time_chunk, B, Hp), lambda i: (i, 0, 0)),
                pl.BlockSpec((B, Hp), lambda i: (0, 0)),   # carried h / h_n
                pl.BlockSpec((B, Hp), lambda i: (0, 0)),   # carried c / c_n
            ],
        ),
        compiler_params=pltpu.CompilerParams(
            dimension_semantics=("arbitrary",),            # recurrence => sequential
            vmem_limit_bytes=32 * 1024 * 1024,
        ),
    )(gx, whh_p)

    output = jnp.transpose(y, (1, 0, 2))[:, :, :H]          # (B, T, H)
    h_n = hn[:, :H].astype(x.dtype)[None]                   # (1, B, H)
    c_n = cn[:, :H].astype(x.dtype)[None]                   # (1, B, H)
    return output, (h_n, c_n)


def _reference_lstm(x, w_ih, w_hh, b_ih, b_hh):
    """Pure-JAX reference (same math as torch.nn.LSTM, batch_first)."""
    B, T, D = x.shape
    H = w_hh.shape[1]
    hi = jax.lax.Precision.HIGHEST

    def step(carry, x_t):
        h, c = carry
        gates = (jnp.dot(x_t, w_ih.T, precision=hi)
                 + jnp.dot(h, w_hh.T, precision=hi) + b_ih + b_hh)
        i = jax.nn.sigmoid(gates[:, 0 * H:1 * H])
        f = jax.nn.sigmoid(gates[:, 1 * H:2 * H])
        g = jnp.tanh(gates[:, 2 * H:3 * H])
        o = jax.nn.sigmoid(gates[:, 3 * H:4 * H])
        c = f * c + i * g
        h = o * jnp.tanh(c)
        return (h, c), h

    init = (jnp.zeros((B, H), x.dtype), jnp.zeros((B, H), x.dtype))
    (h_n, c_n), ys = jax.lax.scan(step, init, jnp.transpose(x, (1, 0, 2)))
    return jnp.transpose(ys, (1, 0, 2)), (h_n[None], c_n[None])


if __name__ == "__main__":
    # Small shapes implied by the module: batch=2, seq=8, input_dim=4, hidden=32
    B, T, D, H = 2, 8, 4, 32

    key = jax.random.PRNGKey(0)
    kx, k1, k2, k3, k4 = jax.random.split(key, 5)

    # Deterministic parameter init, matching nn.LSTM's U(-1/sqrt(H), 1/sqrt(H))
    scale = 1.0 / jnp.sqrt(jnp.float32(H))
    w_ih = jax.random.uniform(k1, (4 * H, D), jnp.float32, -scale, scale)
    w_hh = jax.random.uniform(k2, (4 * H, H), jnp.float32, -scale, scale)
    b_ih = jax.random.uniform(k3, (4 * H,), jnp.float32, -scale, scale)
    b_hh = jax.random.uniform(k4, (4 * H,), jnp.float32, -scale, scale)

    x = jax.random.normal(kx, (B, T, D), jnp.float32)

    out, (h_n, c_n) = encoder_forward(x, w_ih, w_hh, b_ih, b_hh)
    jax.block_until_ready((out, h_n, c_n))

    # Silent correctness check against pure-JAX reference
    ref_out, (ref_h, ref_c) = _reference_lstm(x, w_ih, w_hh, b_ih, b_hh)
    assert out.shape == (B, T, H) and h_n.shape == (1, B, H) and c_n.shape == (1, B, H)
    assert jnp.allclose(out, ref_out, atol=1e-5, rtol=1e-5)
    assert jnp.allclose(h_n, ref_h, atol=1e-5, rtol=1e-5)
    assert jnp.allclose(c_n, ref_c, atol=1e-5, rtol=1e-5)

    print("KERNEL_OK")
</pallas_src>

<mosaic_0001>
module attributes {stable_mosaic.version = 11 : i64} {
  func.func @_lstm_recurrence_kernel(%arg0: i32, %arg1: memref<8x2x512xf32, #tpu.memory_space<vmem>>, %arg2: memref<128x512xf32, #tpu.memory_space<vmem>>, %arg3: memref<8x2x128xf32, #tpu.memory_space<vmem>>, %arg4: memref<2x128xf32, #tpu.memory_space<vmem>>, %arg5: memref<2x128xf32, #tpu.memory_space<vmem>>) attributes {dimension_semantics = [#tpu.dimension_semantics<arbitrary>], iteration_bounds = array<i64: 1>, scalar_prefetch = 0 : i64, scratch_operands = 0 : i64, tpu.core_type = #tpu.core_type<tc>, window_params = [{transform_indices = @transform_0, window_bounds = array<i64: 8, 2, 512>}, {pipeline_mode = #tpu.pipeline_mode<synchronous>, transform_indices = @transform_1, window_bounds = array<i64: 128, 512>}, {transform_indices = @transform_2, window_bounds = array<i64: 8, 2, 128>}, {pipeline_mode = #tpu.pipeline_mode<synchronous>, transform_indices = @transform_3, window_bounds = array<i64: 2, 128>}, {pipeline_mode = #tpu.pipeline_mode<synchronous>, transform_indices = @transform_4, window_bounds = array<i64: 2, 128>}]} {
    %c0_i32 = arith.constant 0 : i32
    %0 = arith.cmpi eq, %arg0, %c0_i32 : i32
    %1 = arith.extui %0 : i1 to i32
    %c0_i32_0 = arith.constant 0 : i32
    %2 = arith.cmpi ne, %1, %c0_i32_0 : i32
    scf.if %2 {
      %cst_178 = arith.constant 0.000000e+00 : f32
      %356 = vector.broadcast %cst_178 : f32 to vector<2x128xf32>
      %c0_179 = arith.constant 0 : index
      %c0_180 = arith.constant 0 : index
      %357 = vector.load %arg4[%c0_179, %c0_180] : memref<2x128xf32, #tpu.memory_space<vmem>>, vector<2x128xf32>
      tpu.vector_store %arg4[%c0_179, %c0_180], %356 {strides = array<i32>} : memref<2x128xf32, #tpu.memory_space<vmem>>, vector<2x128xf32>,
      %cst_181 = arith.constant 0.000000e+00 : f32
      %358 = vector.broadcast %cst_181 : f32 to vector<2x128xf32>
      %c0_182 = arith.constant 0 : index
      %c0_183 = arith.constant 0 : index
      %359 = vector.load %arg5[%c0_182, %c0_183] : memref<2x128xf32, #tpu.memory_space<vmem>>, vector<2x128xf32>
      tpu.vector_store %arg5[%c0_182, %c0_183], %358 {strides = array<i32>} : memref<2x128xf32, #tpu.memory_space<vmem>>, vector<2x128xf32>,
    } else {
    }
    %c0 = arith.constant 0 : index
    %c0_1 = arith.constant 0 : index
    %3 = vector.load %arg2[%c0, %c0_1] : memref<128x512xf32, #tpu.memory_space<vmem>>, vector<128x512xf32>
    %c0_i32_2 = arith.constant 0 : i32
    %c0_3 = arith.constant 0 : index
    %c0_4 = arith.constant 0 : index
    %4 = vector.load %arg4[%c0_3, %c0_4] : memref<2x128xf32, #tpu.memory_space<vmem>>, vector<2x128xf32>
    %c0_5 = arith.constant 0 : index
    %c0_6 = arith.constant 0 : index
    %5 = vector.load %arg5[%c0_5, %c0_6] : memref<2x128xf32, #tpu.memory_space<vmem>>, vector<2x128xf32>
    %6 = arith.index_cast %c0_i32_2 : i32 to index
    %c0_7 = arith.constant 0 : index
    %c0_8 = arith.constant 0 : index
    %7 = vector.load %arg1[%6, %c0_7, %c0_8] : memref<8x2x512xf32, #tpu.memory_space<vmem>>, vector<1x2x512xf32>
    %8 = vector.shape_cast %7 : vector<1x2x512xf32> to vector<2x512xf32>
    %cst = arith.constant dense<0.000000e+00> : vector<2x512xf32>
    %9 = tpu.matmul %4, %3, %cst {dimension_numbers = #tpu.dot_dimension_numbers<[1], [0], [0], [1], [0, 0, 1, 1], [], []>} : vector<2x128xf32>, vector<128x512xf32>, vector<2x512xf32> -> vector<2x512xf32>
    %10 = arith.addf %8, %9 : vector<2x512xf32>
    %11 = vector.extract_strided_slice %10 {offsets = [0, 0], sizes = [2, 128], strides = [1, 1]} : vector<2x512xf32> to vector<2x128xf32>
    %cst_9 = arith.constant 5.000000e-01 : f32
    %12 = vector.broadcast %cst_9 : f32 to vector<2x128xf32>
    %13 = arith.mulf %12, %11 : vector<2x128xf32>
    %14 = math.tanh %13 : vector<2x128xf32>
    %cst_10 = arith.constant 5.000000e-01 : f32
    %15 = vector.broadcast %cst_10 : f32 to vector<2x128xf32>
    %16 = arith.mulf %15, %14 : vector<2x128xf32>
    %cst_11 = arith.constant 5.000000e-01 : f32
    %17 = vector.broadcast %cst_11 : f32 to vector<2x128xf32>
    %18 = arith.addf %16, %17 : vector<2x128xf32>
    %19 = vector.extract_strided_slice %10 {offsets = [0, 128], sizes = [2, 128], strides = [1, 1]} : vector<2x512xf32> to vector<2x128xf32>
    %cst_12 = arith.constant 5.000000e-01 : f32
    %20 = vector.broadcast %cst_12 : f32 to vector<2x128xf32>
    %21 = arith.mulf %20, %19 : vector<2x128xf32>
    %22 = math.tanh %21 : vector<2x128xf32>
    %cst_13 = arith.constant 5.000000e-01 : f32
    %23 = vector.broadcast %cst_13 : f32 to vector<2x128xf32>
    %24 = arith.mulf %23, %22 : vector<2x128xf32>
    %cst_14 = arith.constant 5.000000e-01 : f32
    %25 = vector.broadcast %cst_14 : f32 to vector<2x128xf32>
    %26 = arith.addf %24, %25 : vector<2x128xf32>
    %27 = vector.extract_strided_slice %10 {offsets = [0, 256], sizes = [2, 128], strides = [1, 1]} : vector<2x512xf32> to vector<2x128xf32>
    %28 = math.tanh %27 : vector<2x128xf32>
    %29 = vector.extract_strided_slice %10 {offsets = [0, 384], sizes = [2, 128], strides = [1, 1]} : vector<2x512xf32> to vector<2x128xf32>
    %cst_15 = arith.constant 5.000000e-01 : f32
    %30 = vector.broadcast %cst_15 : f32 to vector<2x128xf32>
    %31 = arith.mulf %30, %29 : vector<2x128xf32>
    %32 = math.tanh %31 : vector<2x128xf32>
    %cst_16 = arith.constant 5.000000e-01 : f32
    %33 = vector.broadcast %cst_16 : f32 to vector<2x128xf32>
    %34 = arith.mulf %33, %32 : vector<2x128xf32>
    %cst_17 = arith.constant 5.000000e-01 : f32
    %35 = vector.broadcast %cst_17 : f32 to vector<2x128xf32>
    %36 = arith.addf %34, %35 : vector<2x128xf32>
    %37 = arith.mulf %26, %5 : vector<2x128xf32>
    %38 = arith.mulf %18, %28 : vector<2x128xf32>
    %39 = arith.addf %37, %38 : vector<2x128xf32>
    %40 = math.tanh %39 : vector<2x128xf32>
    %41 = arith.mulf %36, %40 : vector<2x128xf32>
    %c0_18 = arith.constant 0 : index
    %c0_19 = arith.constant 0 : index
    %42 = vector.load %arg5[%c0_18, %c0_19] : memref<2x128xf32, #tpu.memory_space<vmem>>, vector<2x128xf32>
    tpu.vector_store %arg5[%c0_18, %c0_19], %39 {strides = array<i32>} : memref<2x128xf32, #tpu.memory_space<vmem>>, vector<2x128xf32>,
    %c0_20 = arith.constant 0 : index
    %c0_21 = arith.constant 0 : index
    %43 = vector.load %arg4[%c0_20, %c0_21] : memref<2x128xf32, #tpu.memory_space<vmem>>, vector<2x128xf32>
    tpu.vector_store %arg4[%c0_20, %c0_21], %41 {strides = array<i32>} : memref<2x128xf32, #tpu.memory_space<vmem>>, vector<2x128xf32>,
    %44 = arith.index_cast %c0_i32_2 : i32 to index
    %c0_22 = arith.constant 0 : index
    %c0_23 = arith.constant 0 : index
    %45 = vector.load %arg3[%44, %c0_22, %c0_23] : memref<8x2x128xf32, #tpu.memory_space<vmem>>, vector<1x2x128xf32>
    %46 = vector.shape_cast %45 : vector<1x2x128xf32> to vector<2x128xf32>
    %47 = vector.shape_cast %41 : vector<2x128xf32> to vector<1x2x128xf32>
    tpu.vector_store %arg3[%44, %c0_22, %c0_23], %47 {strides = array<i32>} : memref<8x2x128xf32, #tpu.memory_space<vmem>>, vector<1x2x128xf32>,
    %c1_i32 = arith.constant 1 : i32
    %c0_24 = arith.constant 0 : index
    %c0_25 = arith.constant 0 : index
    %48 = vector.load %arg4[%c0_24, %c0_25] : memref<2x128xf32, #tpu.memory_space<vmem>>, vector<2x128xf32>
    %c0_26 = arith.constant 0 : index
    %c0_27 = arith.constant 0 : index
    %49 = vector.load %arg5[%c0_26, %c0_27] : memref<2x128xf32, #tpu.memory_space<vmem>>, vector<2x128xf32>
    %50 = arith.index_cast %c1_i32 : i32 to index
    %c0_28 = arith.constant 0 : index
    %c0_29 = arith.constant 0 : index
    %51 = vector.load %arg1[%50, %c0_28, %c0_29] : memref<8x2x512xf32, #tpu.memory_space<vmem>>, vector<1x2x512xf32>
    %52 = vector.shape_cast %51 : vector<1x2x512xf32> to vector<2x512xf32>
    %cst_30 = arith.constant dense<0.000000e+00> : vector<2x512xf32>
    %53 = tpu.matmul %48, %3, %cst_30 {dimension_numbers = #tpu.dot_dimension_numbers<[1], [0], [0], [1], [0, 0, 1, 1], [], []>} : vector<2x128xf32>, vector<128x512xf32>, vector<2x512xf32> -> vector<2x512xf32>
    %54 = arith.addf %52, %53 : vector<2x512xf32>
    %55 = vector.extract_strided_slice %54 {offsets = [0, 0], sizes = [2, 128], strides = [1, 1]} : vector<2x512xf32> to vector<2x128xf32>
    %cst_31 = arith.constant 5.000000e-01 : f32
    %56 = vector.broadcast %cst_31 : f32 to vector<2x128xf32>
    %57 = arith.mulf %56, %55 : vector<2x128xf32>
    %58 = math.tanh %57 : vector<2x128xf32>
    %cst_32 = arith.constant 5.000000e-01 : f32
    %59 = vector.broadcast %cst_32 : f32 to vector<2x128xf32>
    %60 = arith.mulf %59, %58 : vector<2x128xf32>
    %cst_33 = arith.constant 5.000000e-01 : f32
    %61 = vector.broadcast %cst_33 : f32 to vector<2x128xf32>
    %62 = arith.addf %60, %61 : vector<2x128xf32>
    %63 = vector.extract_strided_slice %54 {offsets = [0, 128], sizes = [2, 128], strides = [1, 1]} : vector<2x512xf32> to vector<2x128xf32>
    %cst_34 = arith.constant 5.000000e-01 : f32
    %64 = vector.broadcast %cst_34 : f32 to vector<2x128xf32>
    %65 = arith.mulf %64, %63 : vector<2x128xf32>
    %66 = math.tanh %65 : vector<2x128xf32>
    %cst_35 = arith.constant 5.000000e-01 : f32
    %67 = vector.broadcast %cst_35 : f32 to vector<2x128xf32>
    %68 = arith.mulf %67, %66 : vector<2x128xf32>
    %cst_36 = arith.constant 5.000000e-01 : f32
    %69 = vector.broadcast %cst_36 : f32 to vector<2x128xf32>
    %70 = arith.addf %68, %69 : vector<2x128xf32>
    %71 = vector.extract_strided_slice %54 {offsets = [0, 256], sizes = [2, 128], strides = [1, 1]} : vector<2x512xf32> to vector<2x128xf32>
    %72 = math.tanh %71 : vector<2x128xf32>
    %73 = vector.extract_strided_slice %54 {offsets = [0, 384], sizes = [2, 128], strides = [1, 1]} : vector<2x512xf32> to vector<2x128xf32>
    %cst_37 = arith.constant 5.000000e-01 : f32
    %74 = vector.broadcast %cst_37 : f32 to vector<2x128xf32>
    %75 = arith.mulf %74, %73 : vector<2x128xf32>
    %76 = math.tanh %75 : vector<2x128xf32>
    %cst_38 = arith.constant 5.000000e-01 : f32
    %77 = vector.broadcast %cst_38 : f32 to vector<2x128xf32>
    %78 = arith.mulf %77, %76 : vector<2x128xf32>
    %cst_39 = arith.constant 5.000000e-01 : f32
    %79 = vector.broadcast %cst_39 : f32 to vector<2x128xf32>
    %80 = arith.addf %78, %79 : vector<2x128xf32>
    %81 = arith.mulf %70, %49 : vector<2x128xf32>
    %82 = arith.mulf %62, %72 : vector<2x128xf32>
    %83 = arith.addf %81, %82 : vector<2x128xf32>
    %84 = math.tanh %83 : vector<2x128xf32>
    %85 = arith.mulf %80, %84 : vector<2x128xf32>
    %c0_40 = arith.constant 0 : index
    %c0_41 = arith.constant 0 : index
    %86 = vector.load %arg5[%c0_40, %c0_41] : memref<2x128xf32, #tpu.memory_space<vmem>>, vector<2x128xf32>
    tpu.vector_store %arg5[%c0_40, %c0_41], %83 {strides = array<i32>} : memref<2x128xf32, #tpu.memory_space<vmem>>, vector<2x128xf32>,
    %c0_42 = arith.constant 0 : index
    %c0_43 = arith.constant 0 : index
    %87 = vector.load %arg4[%c0_42, %c0_43] : memref<2x128xf32, #tpu.memory_space<vmem>>, vector<2x128xf32>
    tpu.vector_store %arg4[%c0_42, %c0_43], %85 {strides = array<i32>} : memref<2x128xf32, #tpu.memory_space<vmem>>, vector<2x128xf32>,
    %88 = arith.index_cast %c1_i32 : i32 to index
    %c0_44 = arith.constant 0 : index
    %c0_45 = arith.constant 0 : index
    %89 = vector.load %arg3[%88, %c0_44, %c0_45] : memref<8x2x128xf32, #tpu.memory_space<vmem>>, vector<1x2x128xf32>
    %90 = vector.shape_cast %89 : vector<1x2x128xf32> to vector<2x128xf32>
    %91 = vector.shape_cast %85 : vector<2x128xf32> to vector<1x2x128xf32>
    tpu.vector_store %arg3[%88, %c0_44, %c0_45], %91 {strides = array<i32>} : memref<8x2x128xf32, #tpu.memory_space<vmem>>, vector<1x2x128xf32>,
    %c2_i32 = arith.constant 2 : i32
    %c0_46 = arith.constant 0 : index
    %c0_47 = arith.constant 0 : index
    %92 = vector.load %arg4[%c0_46, %c0_47] : memref<2x128xf32, #tpu.memory_space<vmem>>, vector<2x128xf32>
    %c0_48 = arith.constant 0 : index
    %c0_49 = arith.constant 0 : index
    %93 = vector.load %arg5[%c0_48, %c0_49] : memref<2x128xf32, #tpu.memory_space<vmem>>, vector<2x128xf32>
    %94 = arith.index_cast %c2_i32 : i32 to index
    %c0_50 = arith.constant 0 : index
    %c0_51 = arith.constant 0 : index
    %95 = vector.load %arg1[%94, %c0_50, %c0_51] : memref<8x2x512xf32, #tpu.memory_space<vmem>>, vector<1x2x512xf32>
    %96 = vector.shape_cast %95 : vector<1x2x512xf32> to vector<2x512xf32>
    %cst_52 = arith.constant dense<0.000000e+00> : vector<2x512xf32>
    %97 = tpu.matmul %92, %3, %cst_52 {dimension_numbers = #tpu.dot_dimension_numbers<[1], [0], [0], [1], [0, 0, 1, 1], [], []>} : vector<2x128xf32>, vector<128x512xf32>, vector<2x512xf32> -> vector<2x512xf32>
    %98 = arith.addf %96, %97 : vector<2x512xf32>
    %99 = vector.extract_strided_slice %98 {offsets = [0, 0], sizes = [2, 128], strides = [1, 1]} : vector<2x512xf32> to vector<2x128xf32>
    %cst_53 = arith.constant 5.000000e-01 : f32
    %100 = vector.broadcast %cst_53 : f32 to vector<2x128xf32>
    %101 = arith.mulf %100, %99 : vector<2x128xf32>
    %102 = math.tanh %101 : vector<2x128xf32>
    %cst_54 = arith.constant 5.000000e-01 : f32
    %103 = vector.broadcast %cst_54 : f32 to vector<2x128xf32>
    %104 = arith.mulf %103, %102 : vector<2x128xf32>
    %cst_55 = arith.constant 5.000000e-01 : f32
    %105 = vector.broadcast %cst_55 : f32 to vector<2x128xf32>
    %106 = arith.addf %104, %105 : vector<2x128xf32>
    %107 = vector.extract_strided_slice %98 {offsets = [0, 128], sizes = [2, 128], strides = [1, 1]} : vector<2x512xf32> to vector<2x128xf32>
    %cst_56 = arith.constant 5.000000e-01 : f32
    %108 = vector.broadcast %cst_56 : f32 to vector<2x128xf32>
    %109 = arith.mulf %108, %107 : vector<2x128xf32>
    %110 = math.tanh %109 : vector<2x128xf32>
    %cst_57 = arith.constant 5.000000e-01 : f32
    %111 = vector.broadcast %cst_57 : f32 to vector<2x128xf32>
    %112 = arith.mulf %111, %110 : vector<2x128xf32>
    %cst_58 = arith.constant 5.000000e-01 : f32
    %113 = vector.broadcast %cst_58 : f32 to vector<2x128xf32>
    %114 = arith.addf %112, %113 : vector<2x128xf32>
    %115 = vector.extract_strided_slice %98 {offsets = [0, 256], sizes = [2, 128], strides = [1, 1]} : vector<2x512xf32> to vector<2x128xf32>
    %116 = math.tanh %115 : vector<2x128xf32>
    %117 = vector.extract_strided_slice %98 {offsets = [0, 384], sizes = [2, 128], strides = [1, 1]} : vector<2x512xf32> to vector<2x128xf32>
    %cst_59 = arith.constant 5.000000e-01 : f32
    %118 = vector.broadcast %cst_59 : f32 to vector<2x128xf32>
    %119 = arith.mulf %118, %117 : vector<2x128xf32>
    %120 = math.tanh %119 : vector<2x128xf32>
    %cst_60 = arith.constant 5.000000e-01 : f32
    %121 = vector.broadcast %cst_60 : f32 to vector<2x128xf32>
    %122 = arith.mulf %121, %120 : vector<2x128xf32>
    %cst_61 = arith.constant 5.000000e-01 : f32
    %123 = vector.broadcast %cst_61 : f32 to vector<2x128xf32>
    %124 = arith.addf %122, %123 : vector<2x128xf32>
    %125 = arith.mulf %114, %93 : vector<2x128xf32>
    %126 = arith.mulf %106, %116 : vector<2x128xf32>
    %127 = arith.addf %125, %126 : vector<2x128xf32>
    %128 = math.tanh %127 : vector<2x128xf32>
    %129 = arith.mulf %124, %128 : vector<2x128xf32>
    %c0_62 = arith.constant 0 : index
    %c0_63 = arith.constant 0 : index
    %130 = vector.load %arg5[%c0_62, %c0_63] : memref<2x128xf32, #tpu.memory_space<vmem>>, vector<2x128xf32>
    tpu.vector_store %arg5[%c0_62, %c0_63], %127 {strides = array<i32>} : memref<2x128xf32, #tpu.memory_space<vmem>>, vector<2x128xf32>,
    %c0_64 = arith.constant 0 : index
    %c0_65 = arith.constant 0 : index
    %131 = vector.load %arg4[%c0_64, %c0_65] : memref<2x128xf32, #tpu.memory_space<vmem>>, vector<2x128xf32>
    tpu.vector_store %arg4[%c0_64, %c0_65], %129 {strides = array<i32>} : memref<2x128xf32, #tpu.memory_space<vmem>>, vector<2x128xf32>,
    %132 = arith.index_cast %c2_i32 : i32 to index
    %c0_66 = arith.constant 0 : index
    %c0_67 = arith.constant 0 : index
    %133 = vector.load %arg3[%132, %c0_66, %c0_67] : memref<8x2x128xf32, #tpu.memory_space<vmem>>, vector<1x2x128xf32>
    %134 = vector.shape_cast %133 : vector<1x2x128xf32> to vector<2x128xf32>
    %135 = vector.shape_cast %129 : vector<2x128xf32> to vector<1x2x128xf32>
    tpu.vector_store %arg3[%132, %c0_66, %c0_67], %135 {strides = array<i32>} : memref<8x2x128xf32, #tpu.memory_space<vmem>>, vector<1x2x128xf32>,
    %c3_i32 = arith.constant 3 : i32
    %c0_68 = arith.constant 0 : index
    %c0_69 = arith.constant 0 : index
    %136 = vector.load %arg4[%c0_68, %c0_69] : memref<2x128xf32, #tpu.memory_space<vmem>>, vector<2x128xf32>
    %c0_70 = arith.constant 0 : index
    %c0_71 = arith.constant 0 : index
    %137 = vector.load %arg5[%c0_70, %c0_71] : memref<2x128xf32, #tpu.memory_space<vmem>>, vector<2x128xf32>
    %138 = arith.index_cast %c3_i32 : i32 to index
    %c0_72 = arith.constant 0 : index
    %c0_73 = arith.constant 0 : index
    %139 = vector.load %arg1[%138, %c0_72, %c0_73] : memref<8x2x512xf32, #tpu.memory_space<vmem>>, vector<1x2x512xf32>
    %140 = vector.shape_cast %139 : vector<1x2x512xf32> to vector<2x512xf32>
    %cst_74 = arith.constant dense<0.000000e+00> : vector<2x512xf32>
    %141 = tpu.matmul %136, %3, %cst_74 {dimension_numbers = #tpu.dot_dimension_numbers<[1], [0], [0], [1], [0, 0, 1, 1], [], []>} : vector<2x128xf32>, vector<128x512xf32>, vector<2x512xf32> -> vector<2x512xf32>
    %142 = arith.addf %140, %141 : vector<2x512xf32>
    %143 = vector.extract_strided_slice %142 {offsets = [0, 0], sizes = [2, 128], strides = [1, 1]} : vector<2x512xf32> to vector<2x128xf32>
    %cst_75 = arith.constant 5.000000e-01 : f32
    %144 = vector.broadcast %cst_75 : f32 to vector<2x128xf32>
    %145 = arith.mulf %144, %143 : vector<2x128xf32>
    %146 = math.tanh %145 : vector<2x128xf32>
    %cst_76 = arith.constant 5.000000e-01 : f32
    %147 = vector.broadcast %cst_76 : f32 to vector<2x128xf32>
    %148 = arith.mulf %147, %146 : vector<2x128xf32>
    %cst_77 = arith.constant 5.000000e-01 : f32
    %149 = vector.broadcast %cst_77 : f32 to vector<2x128xf32>
    %150 = arith.addf %148, %149 : vector<2x128xf32>
    %151 = vector.extract_strided_slice %142 {offsets = [0, 128], sizes = [2, 128], strides = [1, 1]} : vector<2x512xf32> to vector<2x128xf32>
    %cst_78 = arith.constant 5.000000e-01 : f32
    %152 = vector.broadcast %cst_78 : f32 to vector<2x128xf32>
    %153 = arith.mulf %152, %151 : vector<2x128xf32>
    %154 = math.tanh %153 : vector<2x128xf32>
    %cst_79 = arith.constant 5.000000e-01 : f32
    %155 = vector.broadcast %cst_79 : f32 to vector<2x128xf32>
    %156 = arith.mulf %155, %154 : vector<2x128xf32>
    %cst_80 = arith.constant 5.000000e-01 : f32
    %157 = vector.broadcast %cst_80 : f32 to vector<2x128xf32>
    %158 = arith.addf %156, %157 : vector<2x128xf32>
    %159 = vector.extract_strided_slice %142 {offsets = [0, 256], sizes = [2, 128], strides = [1, 1]} : vector<2x512xf32> to vector<2x128xf32>
    %160 = math.tanh %159 : vector<2x128xf32>
    %161 = vector.extract_strided_slice %142 {offsets = [0, 384], sizes = [2, 128], strides = [1, 1]} : vector<2x512xf32> to vector<2x128xf32>
    %cst_81 = arith.constant 5.000000e-01 : f32
    %162 = vector.broadcast %cst_81 : f32 to vector<2x128xf32>
    %163 = arith.mulf %162, %161 : vector<2x128xf32>
    %164 = math.tanh %163 : vector<2x128xf32>
    %cst_82 = arith.constant 5.000000e-01 : f32
    %165 = vector.broadcast %cst_82 : f32 to vector<2x128xf32>
    %166 = arith.mulf %165, %164 : vector<2x128xf32>
    %cst_83 = arith.constant 5.000000e-01 : f32
    %167 = vector.broadcast %cst_83 : f32 to vector<2x128xf32>
    %168 = arith.addf %166, %167 : vector<2x128xf32>
    %169 = arith.mulf %158, %137 : vector<2x128xf32>
    %170 = arith.mulf %150, %160 : vector<2x128xf32>
    %171 = arith.addf %169, %170 : vector<2x128xf32>
    %172 = math.tanh %171 : vector<2x128xf32>
    %173 = arith.mulf %168, %172 : vector<2x128xf32>
    %c0_84 = arith.constant 0 : index
    %c0_85 = arith.constant 0 : index
    %174 = vector.load %arg5[%c0_84, %c0_85] : memref<2x128xf32, #tpu.memory_space<vmem>>, vector<2x128xf32>
    tpu.vector_store %arg5[%c0_84, %c0_85], %171 {strides = array<i32>} : memref<2x128xf32, #tpu.memory_space<vmem>>, vector<2x128xf32>,
    %c0_86 = arith.constant 0 : index
    %c0_87 = arith.constant 0 : index
    %175 = vector.load %arg4[%c0_86, %c0_87] : memref<2x128xf32, #tpu.memory_space<vmem>>, vector<2x128xf32>
    tpu.vector_store %arg4[%c0_86, %c0_87], %173 {strides = array<i32>} : memref<2x128xf32, #tpu.memory_space<vmem>>, vector<2x128xf32>,
    %176 = arith.index_cast %c3_i32 : i32 to index
    %c0_88 = arith.constant 0 : index
    %c0_89 = arith.constant 0 : index
    %177 = vector.load %arg3[%176, %c0_88, %c0_89] : memref<8x2x128xf32, #tpu.memory_space<vmem>>, vector<1x2x128xf32>
    %178 = vector.shape_cast %177 : vector<1x2x128xf32> to vector<2x128xf32>
    %179 = vector.shape_cast %173 : vector<2x128xf32> to vector<1x2x128xf32>
    tpu.vector_store %arg3[%176, %c0_88, %c0_89], %179 {strides = array<i32>} : memref<8x2x128xf32, #tpu.memory_space<vmem>>, vector<1x2x128xf32>,
    %c4_i32 = arith.constant 4 : i32
    %c0_90 = arith.constant 0 : index
    %c0_91 = arith.constant 0 : index
    %180 = vector.load %arg4[%c0_90, %c0_91] : memref<2x128xf32, #tpu.memory_space<vmem>>, vector<2x128xf32>
    %c0_92 = arith.constant 0 : index
    %c0_93 = arith.constant 0 : index
    %181 = vector.load %arg5[%c0_92, %c0_93] : memref<2x128xf32, #tpu.memory_space<vmem>>, vector<2x128xf32>
    %182 = arith.index_cast %c4_i32 : i32 to index
    %c0_94 = arith.constant 0 : index
    %c0_95 = arith.constant 0 : index
    %183 = vector.load %arg1[%182, %c0_94, %c0_95] : memref<8x2x512xf32, #tpu.memory_space<vmem>>, vector<1x2x512xf32>
    %184 = vector.shape_cast %183 : vector<1x2x512xf32> to vector<2x512xf32>
    %cst_96 = arith.constant dense<0.000000e+00> : vector<2x512xf32>
    %185 = tpu.matmul %180, %3, %cst_96 {dimension_numbers = #tpu.dot_dimension_numbers<[1], [0], [0], [1], [0, 0, 1, 1], [], []>} : vector<2x128xf32>, vector<128x512xf32>, vector<2x512xf32> -> vector<2x512xf32>
    %186 = arith.addf %184, %185 : vector<2x512xf32>
    %187 = vector.extract_strided_slice %186 {offsets = [0, 0], sizes = [2, 128], strides = [1, 1]} : vector<2x512xf32> to vector<2x128xf32>
    %cst_97 = arith.constant 5.000000e-01 : f32
    %188 = vector.broadcast %cst_97 : f32 to vector<2x128xf32>
    %189 = arith.mulf %188, %187 : vector<2x128xf32>
    %190 = math.tanh %189 : vector<2x128xf32>
    %cst_98 = arith.constant 5.000000e-01 : f32
    %191 = vector.broadcast %cst_98 : f32 to vector<2x128xf32>
    %192 = arith.mulf %191, %190 : vector<2x128xf32>
    %cst_99 = arith.constant 5.000000e-01 : f32
    %193 = vector.broadcast %cst_99 : f32 to vector<2x128xf32>
    %194 = arith.addf %192, %193 : vector<2x128xf32>
    %195 = vector.extract_strided_slice %186 {offsets = [0, 128], sizes = [2, 128], strides = [1, 1]} : vector<2x512xf32> to vector<2x128xf32>
    %cst_100 = arith.constant 5.000000e-01 : f32
    %196 = vector.broadcast %cst_100 : f32 to vector<2x128xf32>
    %197 = arith.mulf %196, %195 : vector<2x128xf32>
    %198 = math.tanh %197 : vector<2x128xf32>
    %cst_101 = arith.constant 5.000000e-01 : f32
    %199 = vector.broadcast %cst_101 : f32 to vector<2x128xf32>
    %200 = arith.mulf %199, %198 : vector<2x128xf32>
    %cst_102 = arith.constant 5.000000e-01 : f32
    %201 = vector.broadcast %cst_102 : f32 to vector<2x128xf32>
    %202 = arith.addf %200, %201 : vector<2x128xf32>
    %203 = vector.extract_strided_slice %186 {offsets = [0, 256], sizes = [2, 128], strides = [1, 1]} : vector<2x512xf32> to vector<2x128xf32>
    %204 = math.tanh %203 : vector<2x128xf32>
    %205 = vector.extract_strided_slice %186 {offsets = [0, 384], sizes = [2, 128], strides = [1, 1]} : vector<2x512xf32> to vector<2x128xf32>
    %cst_103 = arith.constant 5.000000e-01 : f32
    %206 = vector.broadcast %cst_103 : f32 to vector<2x128xf32>
    %207 = arith.mulf %206, %205 : vector<2x128xf32>
    %208 = math.tanh %207 : vector<2x128xf32>
    %cst_104 = arith.constant 5.000000e-01 : f32
    %209 = vector.broadcast %cst_104 : f32 to vector<2x128xf32>
    %210 = arith.mulf %209, %208 : vector<2x128xf32>
    %cst_105 = arith.constant 5.000000e-01 : f32
    %211 = vector.broadcast %cst_105 : f32 to vector<2x128xf32>
    %212 = arith.addf %210, %211 : vector<2x128xf32>
    %213 = arith.mulf %202, %181 : vector<2x128xf32>
    %214 = arith.mulf %194, %204 : vector<2x128xf32>
    %215 = arith.addf %213, %214 : vector<2x128xf32>
    %216 = math.tanh %215 : vector<2x128xf32>
    %217 = arith.mulf %212, %216 : vector<2x128xf32>
    %c0_106 = arith.constant 0 : index
    %c0_107 = arith.constant 0 : index
    %218 = vector.load %arg5[%c0_106, %c0_107] : memref<2x128xf32, #tpu.memory_space<vmem>>, vector<2x128xf32>
    tpu.vector_store %arg5[%c0_106, %c0_107], %215 {strides = array<i32>} : memref<2x128xf32, #tpu.memory_space<vmem>>, vector<2x128xf32>,
    %c0_108 = arith.constant 0 : index
    %c0_109 = arith.constant 0 : index
    %219 = vector.load %arg4[%c0_108, %c0_109] : memref<2x128xf32, #tpu.memory_space<vmem>>, vector<2x128xf32>
    tpu.vector_store %arg4[%c0_108, %c0_109], %217 {strides = array<i32>} : memref<2x128xf32, #tpu.memory_space<vmem>>, vector<2x128xf32>,
    %220 = arith.index_cast %c4_i32 : i32 to index
    %c0_110 = arith.constant 0 : index
    %c0_111 = arith.constant 0 : index
    %221 = vector.load %arg3[%220, %c0_110, %c0_111] : memref<8x2x128xf32, #tpu.memory_space<vmem>>, vector<1x2x128xf32>
    %222 = vector.shape_cast %221 : vector<1x2x128xf32> to vector<2x128xf32>
    %223 = vector.shape_cast %217 : vector<2x128xf32> to vector<1x2x128xf32>
    tpu.vector_store %arg3[%220, %c0_110, %c0_111], %223 {strides = array<i32>} : memref<8x2x128xf32, #tpu.memory_space<vmem>>, vector<1x2x128xf32>,
    %c5_i32 = arith.constant 5 : i32
    %c0_112 = arith.constant 0 : index
    %c0_113 = arith.constant 0 : index
    %224 = vector.load %arg4[%c0_112, %c0_113] : memref<2x128xf32, #tpu.memory_space<vmem>>, vector<2x128xf32>
    %c0_114 = arith.constant 0 : index
    %c0_115 = arith.constant 0 : index
    %225 = vector.load %arg5[%c0_114, %c0_115] : memref<2x128xf32, #tpu.memory_space<vmem>>, vector<2x128xf32>
    %226 = arith.index_cast %c5_i32 : i32 to index
    %c0_116 = arith.constant 0 : index
    %c0_117 = arith.constant 0 : index
    %227 = vector.load %arg1[%226, %c0_116, %c0_117] : memref<8x2x512xf32, #tpu.memory_space<vmem>>, vector<1x2x512xf32>
    %228 = vector.shape_cast %227 : vector<1x2x512xf32> to vector<2x512xf32>
    %cst_118 = arith.constant dense<0.000000e+00> : vector<2x512xf32>
    %229 = tpu.matmul %224, %3, %cst_118 {dimension_numbers = #tpu.dot_dimension_numbers<[1], [0], [0], [1], [0, 0, 1, 1], [], []>} : vector<2x128xf32>, vector<128x512xf32>, vector<2x512xf32> -> vector<2x512xf32>
    %230 = arith.addf %228, %229 : vector<2x512xf32>
    %231 = vector.extract_strided_slice %230 {offsets = [0, 0], sizes = [2, 128], strides = [1, 1]} : vector<2x512xf32> to vector<2x128xf32>
    %cst_119 = arith.constant 5.000000e-01 : f32
    %232 = vector.broadcast %cst_119 : f32 to vector<2x128xf32>
    %233 = arith.mulf %232, %231 : vector<2x128xf32>
    %234 = math.tanh %233 : vector<2x128xf32>
    %cst_120 = arith.constant 5.000000e-01 : f32
    %235 = vector.broadcast %cst_120 : f32 to vector<2x128xf32>
    %236 = arith.mulf %235, %234 : vector<2x128xf32>
    %cst_121 = arith.constant 5.000000e-01 : f32
    %237 = vector.broadcast %cst_121 : f32 to vector<2x128xf32>
    %238 = arith.addf %236, %237 : vector<2x128xf32>
    %239 = vector.extract_strided_slice %230 {offsets = [0, 128], sizes = [2, 128], strides = [1, 1]} : vector<2x512xf32> to vector<2x128xf32>
    %cst_122 = arith.constant 5.000000e-01 : f32
    %240 = vector.broadcast %cst_122 : f32 to vector<2x128xf32>
    %241 = arith.mulf %240, %239 : vector<2x128xf32>
    %242 = math.tanh %241 : vector<2x128xf32>
    %cst_123 = arith.constant 5.000000e-01 : f32
    %243 = vector.broadcast %cst_123 : f32 to vector<2x128xf32>
    %244 = arith.mulf %243, %242 : vector<2x128xf32>
    %cst_124 = arith.constant 5.000000e-01 : f32
    %245 = vector.broadcast %cst_124 : f32 to vector<2x128xf32>
    %246 = arith.addf %244, %245 : vector<2x128xf32>
    %247 = vector.extract_strided_slice %230 {offsets = [0, 256], sizes = [2, 128], strides = [1, 1]} : vector<2x512xf32> to vector<2x128xf32>
    %248 = math.tanh %247 : vector<2x128xf32>
    %249 = vector.extract_strided_slice %230 {offsets = [0, 384], sizes = [2, 128], strides = [1, 1]} : vector<2x512xf32> to vector<2x128xf32>
    %cst_125 = arith.constant 5.000000e-01 : f32
    %250 = vector.broadcast %cst_125 : f32 to vector<2x128xf32>
    %251 = arith.mulf %250, %249 : vector<2x128xf32>
    %252 = math.tanh %251 : vector<2x128xf32>
    %cst_126 = arith.constant 5.000000e-01 : f32
    %253 = vector.broadcast %cst_126 : f32 to vector<2x128xf32>
    %254 = arith.mulf %253, %252 : vector<2x128xf32>
    %cst_127 = arith.constant 5.000000e-01 : f32
    %255 = vector.broadcast %cst_127 : f32 to vector<2x128xf32>
    %256 = arith.addf %254, %255 : vector<2x128xf32>
    %257 = arith.mulf %246, %225 : vector<2x128xf32>
    %258 = arith.mulf %238, %248 : vector<2x128xf32>
    %259 = arith.addf %257, %258 : vector<2x128xf32>
    %260 = math.tanh %259 : vector<2x128xf32>
    %261 = arith.mulf %256, %260 : vector<2x128xf32>
    %c0_128 = arith.constant 0 : index
    %c0_129 = arith.constant 0 : index
    %262 = vector.load %arg5[%c0_128, %c0_129] : memref<2x128xf32, #tpu.memory_space<vmem>>, vector<2x128xf32>
    tpu.vector_store %arg5[%c0_128, %c0_129], %259 {strides = array<i32>} : memref<2x128xf32, #tpu.memory_space<vmem>>, vector<2x128xf32>,
    %c0_130 = arith.constant 0 : index
    %c0_131 = arith.constant 0 : index
    %263 = vector.load %arg4[%c0_130, %c0_131] : memref<2x128xf32, #tpu.memory_space<vmem>>, vector<2x128xf32>
    tpu.vector_store %arg4[%c0_130, %c0_131], %261 {strides = array<i32>} : memref<2x128xf32, #tpu.memory_space<vmem>>, vector<2x128xf32>,
    %264 = arith.index_cast %c5_i32 : i32 to index
    %c0_132 = arith.constant 0 : index
    %c0_133 = arith.constant 0 : index
    %265 = vector.load %arg3[%264, %c0_132, %c0_133] : memref<8x2x128xf32, #tpu.memory_space<vmem>>, vector<1x2x128xf32>
    %266 = vector.shape_cast %265 : vector<1x2x128xf32> to vector<2x128xf32>
    %267 = vector.shape_cast %261 : vector<2x128xf32> to vector<1x2x128xf32>
    tpu.vector_store %arg3[%264, %c0_132, %c0_133], %267 {strides = array<i32>} : memref<8x2x128xf32, #tpu.memory_space<vmem>>, vector<1x2x128xf32>,
    %c6_i32 = arith.constant 6 : i32
    %c0_134 = arith.constant 0 : index
    %c0_135 = arith.constant 0 : index
    %268 = vector.load %arg4[%c0_134, %c0_135] : memref<2x128xf32, #tpu.memory_space<vmem>>, vector<2x128xf32>
    %c0_136 = arith.constant 0 : index
    %c0_137 = arith.constant 0 : index
    %269 = vector.load %arg5[%c0_136, %c0_137] : memref<2x128xf32, #tpu.memory_space<vmem>>, vector<2x128xf32>
    %270 = arith.index_cast %c6_i32 : i32 to index
    %c0_138 = arith.constant 0 : index
    %c0_139 = arith.constant 0 : index
    %271 = vector.load %arg1[%270, %c0_138, %c0_139] : memref<8x2x512xf32, #tpu.memory_space<vmem>>, vector<1x2x512xf32>
    %272 = vector.shape_cast %271 : vector<1x2x512xf32> to vector<2x512xf32>
    %cst_140 = arith.constant dense<0.000000e+00> : vector<2x512xf32>
    %273 = tpu.matmul %268, %3, %cst_140 {dimension_numbers = #tpu.dot_dimension_numbers<[1], [0], [0], [1], [0, 0, 1, 1], [], []>} : vector<2x128xf32>, vector<128x512xf32>, vector<2x512xf32> -> vector<2x512xf32>
    %274 = arith.addf %272, %273 : vector<2x512xf32>
    %275 = vector.extract_strided_slice %274 {offsets = [0, 0], sizes = [2, 128], strides = [1, 1]} : vector<2x512xf32> to vector<2x128xf32>
    %cst_141 = arith.constant 5.000000e-01 : f32
    %276 = vector.broadcast %cst_141 : f32 to vector<2x128xf32>
    %277 = arith.mulf %276, %275 : vector<2x128xf32>
    %278 = math.tanh %277 : vector<2x128xf32>
    %cst_142 = arith.constant 5.000000e-01 : f32
    %279 = vector.broadcast %cst_142 : f32 to vector<2x128xf32>
    %280 = arith.mulf %279, %278 : vector<2x128xf32>
    %cst_143 = arith.constant 5.000000e-01 : f32
    %281 = vector.broadcast %cst_143 : f32 to vector<2x128xf32>
    %282 = arith.addf %280, %281 : vector<2x128xf32>
    %283 = vector.extract_strided_slice %274 {offsets = [0, 128], sizes = [2, 128], strides = [1, 1]} : vector<2x512xf32> to vector<2x128xf32>
    %cst_144 = arith.constant 5.000000e-01 : f32
    %284 = vector.broadcast %cst_144 : f32 to vector<2x128xf32>
    %285 = arith.mulf %284, %283 : vector<2x128xf32>
    %286 = math.tanh %285 : vector<2x128xf32>
    %cst_145 = arith.constant 5.000000e-01 : f32
    %287 = vector.broadcast %cst_145 : f32 to vector<2x128xf32>
    %288 = arith.mulf %287, %286 : vector<2x128xf32>
    %cst_146 = arith.constant 5.000000e-01 : f32
    %289 = vector.broadcast %cst_146 : f32 to vector<2x128xf32>
    %290 = arith.addf %288, %289 : vector<2x128xf32>
    %291 = vector.extract_strided_slice %274 {offsets = [0, 256], sizes = [2, 128], strides = [1, 1]} : vector<2x512xf32> to vector<2x128xf32>
    %292 = math.tanh %291 : vector<2x128xf32>
    %293 = vector.extract_strided_slice %274 {offsets = [0, 384], sizes = [2, 128], strides = [1, 1]} : vector<2x512xf32> to vector<2x128xf32>
    %cst_147 = arith.constant 5.000000e-01 : f32
    %294 = vector.broadcast %cst_147 : f32 to vector<2x128xf32>
    %295 = arith.mulf %294, %293 : vector<2x128xf32>
    %296 = math.tanh %295 : vector<2x128xf32>
    %cst_148 = arith.constant 5.000000e-01 : f32
    %297 = vector.broadcast %cst_148 : f32 to vector<2x128xf32>
    %298 = arith.mulf %297, %296 : vector<2x128xf32>
    %cst_149 = arith.constant 5.000000e-01 : f32
    %299 = vector.broadcast %cst_149 : f32 to vector<2x128xf32>
    %300 = arith.addf %298, %299 : vector<2x128xf32>
    %301 = arith.mulf %290, %269 : vector<2x128xf32>
    %302 = arith.mulf %282, %292 : vector<2x128xf32>
    %303 = arith.addf %301, %302 : vector<2x128xf32>
    %304 = math.tanh %303 : vector<2x128xf32>
    %305 = arith.mulf %300, %304 : vector<2x128xf32>
    %c0_150 = arith.constant 0 : index
    %c0_151 = arith.constant 0 : index
    %306 = vector.load %arg5[%c0_150, %c0_151] : memref<2x128xf32, #tpu.memory_space<vmem>>, vector<2x128xf32>
    tpu.vector_store %arg5[%c0_150, %c0_151], %303 {strides = array<i32>} : memref<2x128xf32, #tpu.memory_space<vmem>>, vector<2x128xf32>,
    %c0_152 = arith.constant 0 : index
    %c0_153 = arith.constant 0 : index
    %307 = vector.load %arg4[%c0_152, %c0_153] : memref<2x128xf32, #tpu.memory_space<vmem>>, vector<2x128xf32>
    tpu.vector_store %arg4[%c0_152, %c0_153], %305 {strides = array<i32>} : memref<2x128xf32, #tpu.memory_space<vmem>>, vector<2x128xf32>,
    %308 = arith.index_cast %c6_i32 : i32 to index
    %c0_154 = arith.constant 0 : index
    %c0_155 = arith.constant 0 : index
    %309 = vector.load %arg3[%308, %c0_154, %c0_155] : memref<8x2x128xf32, #tpu.memory_space<vmem>>, vector<1x2x128xf32>
    %310 = vector.shape_cast %309 : vector<1x2x128xf32> to vector<2x128xf32>
    %311 = vector.shape_cast %305 : vector<2x128xf32> to vector<1x2x128xf32>
    tpu.vector_store %arg3[%308, %c0_154, %c0_155], %311 {strides = array<i32>} : memref<8x2x128xf32, #tpu.memory_space<vmem>>, vector<1x2x128xf32>,
    %c7_i32 = arith.constant 7 : i32
    %c0_156 = arith.constant 0 : index
    %c0_157 = arith.constant 0 : index
    %312 = vector.load %arg4[%c0_156, %c0_157] : memref<2x128xf32, #tpu.memory_space<vmem>>, vector<2x128xf32>
    %c0_158 = arith.constant 0 : index
    %c0_159 = arith.constant 0 : index
    %313 = vector.load %arg5[%c0_158, %c0_159] : memref<2x128xf32, #tpu.memory_space<vmem>>, vector<2x128xf32>
    %314 = arith.index_cast %c7_i32 : i32 to index
    %c0_160 = arith.constant 0 : index
    %c0_161 = arith.constant 0 : index
    %315 = vector.load %arg1[%314, %c0_160, %c0_161] : memref<8x2x512xf32, #tpu.memory_space<vmem>>, vector<1x2x512xf32>
    %316 = vector.shape_cast %315 : vector<1x2x512xf32> to vector<2x512xf32>
    %cst_162 = arith.constant dense<0.000000e+00> : vector<2x512xf32>
    %317 = tpu.matmul %312, %3, %cst_162 {dimension_numbers = #tpu.dot_dimension_numbers<[1], [0], [0], [1], [0, 0, 1, 1], [], []>} : vector<2x128xf32>, vector<128x512xf32>, vector<2x512xf32> -> vector<2x512xf32>
    %318 = arith.addf %316, %317 : vector<2x512xf32>
    %319 = vector.extract_strided_slice %318 {offsets = [0, 0], sizes = [2, 128], strides = [1, 1]} : vector<2x512xf32> to vector<2x128xf32>
    %cst_163 = arith.constant 5.000000e-01 : f32
    %320 = vector.broadcast %cst_163 : f32 to vector<2x128xf32>
    %321 = arith.mulf %320, %319 : vector<2x128xf32>
    %322 = math.tanh %321 : vector<2x128xf32>
    %cst_164 = arith.constant 5.000000e-01 : f32
    %323 = vector.broadcast %cst_164 : f32 to vector<2x128xf32>
    %324 = arith.mulf %323, %322 : vector<2x128xf32>
    %cst_165 = arith.constant 5.000000e-01 : f32
    %325 = vector.broadcast %cst_165 : f32 to vector<2x128xf32>
    %326 = arith.addf %324, %325 : vector<2x128xf32>
    %327 = vector.extract_strided_slice %318 {offsets = [0, 128], sizes = [2, 128], strides = [1, 1]} : vector<2x512xf32> to vector<2x128xf32>
    %cst_166 = arith.constant 5.000000e-01 : f32
    %328 = vector.broadcast %cst_166 : f32 to vector<2x128xf32>
    %329 = arith.mulf %328, %327 : vector<2x128xf32>
    %330 = math.tanh %329 : vector<2x128xf32>
    %cst_167 = arith.constant 5.000000e-01 : f32
    %331 = vector.broadcast %cst_167 : f32 to vector<2x128xf32>
    %332 = arith.mulf %331, %330 : vector<2x128xf32>
    %cst_168 = arith.constant 5.000000e-01 : f32
    %333 = vector.broadcast %cst_168 : f32 to vector<2x128xf32>
    %334 = arith.addf %332, %333 : vector<2x128xf32>
    %335 = vector.extract_strided_slice %318 {offsets = [0, 256], sizes = [2, 128], strides = [1, 1]} : vector<2x512xf32> to vector<2x128xf32>
    %336 = math.tanh %335 : vector<2x128xf32>
    %337 = vector.extract_strided_slice %318 {offsets = [0, 384], sizes = [2, 128], strides = [1, 1]} : vector<2x512xf32> to vector<2x128xf32>
    %cst_169 = arith.constant 5.000000e-01 : f32
    %338 = vector.broadcast %cst_169 : f32 to vector<2x128xf32>
    %339 = arith.mulf %338, %337 : vector<2x128xf32>
    %340 = math.tanh %339 : vector<2x128xf32>
    %cst_170 = arith.constant 5.000000e-01 : f32
    %341 = vector.broadcast %cst_170 : f32 to vector<2x128xf32>
    %342 = arith.mulf %341, %340 : vector<2x128xf32>
    %cst_171 = arith.constant 5.000000e-01 : f32
    %343 = vector.broadcast %cst_171 : f32 to vector<2x128xf32>
    %344 = arith.addf %342, %343 : vector<2x128xf32>
    %345 = arith.mulf %334, %313 : vector<2x128xf32>
    %346 = arith.mulf %326, %336 : vector<2x128xf32>
    %347 = arith.addf %345, %346 : vector<2x128xf32>
    %348 = math.tanh %347 : vector<2x128xf32>
    %349 = arith.mulf %344, %348 : vector<2x128xf32>
    %c0_172 = arith.constant 0 : index
    %c0_173 = arith.constant 0 : index
    %350 = vector.load %arg5[%c0_172, %c0_173] : memref<2x128xf32, #tpu.memory_space<vmem>>, vector<2x128xf32>
    tpu.vector_store %arg5[%c0_172, %c0_173], %347 {strides = array<i32>} : memref<2x128xf32, #tpu.memory_space<vmem>>, vector<2x128xf32>,
    %c0_174 = arith.constant 0 : index
    %c0_175 = arith.constant 0 : index
    %351 = vector.load %arg4[%c0_174, %c0_175] : memref<2x128xf32, #tpu.memory_space<vmem>>, vector<2x128xf32>
    tpu.vector_store %arg4[%c0_174, %c0_175], %349 {strides = array<i32>} : memref<2x128xf32, #tpu.memory_space<vmem>>, vector<2x128xf32>,
    %352 = arith.index_cast %c7_i32 : i32 to index
    %c0_176 = arith.constant 0 : index
    %c0_177 = arith.constant 0 : index
    %353 = vector.load %arg3[%352, %c0_176, %c0_177] : memref<8x2x128xf32, #tpu.memory_space<vmem>>, vector<1x2x128xf32>
    %354 = vector.shape_cast %353 : vector<1x2x128xf32> to vector<2x128xf32>
    %355 = vector.shape_cast %349 : vector<2x128xf32> to vector<1x2x128xf32>
    tpu.vector_store %arg3[%352, %c0_176, %c0_177], %355 {strides = array<i32>} : memref<8x2x128xf32, #tpu.memory_space<vmem>>, vector<1x2x128xf32>,
    %c8_i32 = arith.constant 8 : i32
    return
  }
  func.func @transform_0(%arg0: i32) -> (i32, i32, i32) {
    %c0_i32 = arith.constant 0 : i32
    %c0_i32_0 = arith.constant 0 : i32
    %c0_i32_1 = arith.constant 0 : i32
    return %arg0, %c0_i32, %c0_i32_0 : i32, i32, i32
  }
  func.func @transform_1(%arg0: i32) -> (i32, i32) {
    %c0_i32 = arith.constant 0 : i32
    %c0_i32_0 = arith.constant 0 : i32
    %c0_i32_1 = arith.constant 0 : i32
    return %c0_i32, %c0_i32_0 : i32, i32
  }
  func.func @transform_2(%arg0: i32) -> (i32, i32, i32) {
    %c0_i32 = arith.constant 0 : i32
    %c0_i32_0 = arith.constant 0 : i32
    %c0_i32_1 = arith.constant 0 : i32
    return %arg0, %c0_i32, %c0_i32_0 : i32, i32, i32
  }
  func.func @transform_3(%arg0: i32) -> (i32, i32) {
    %c0_i32 = arith.constant 0 : i32
    %c0_i32_0 = arith.constant 0 : i32
    %c0_i32_1 = arith.constant 0 : i32
    return %c0_i32, %c0_i32_0 : i32, i32
  }
  func.func @transform_4(%arg0: i32) -> (i32, i32) {
    %c0_i32 = arith.constant 0 : i32
    %c0_i32_0 = arith.constant 0 : i32
    %c0_i32_1 = arith.constant 0 : i32
    return %c0_i32, %c0_i32_0 : i32, i32
  }
}

</mosaic_0001>

<llo_original>
// kernel: tpu_custom_call.1
$region0: #{tpu_custom_call.1}
  #allocation0 [shape = 'u32[]', space=smem, size = 0x4, offset = 0x4, fixed_abs, tag = 'smem constant byte address 0x4 - core index']
  #allocation1 [shape = 'u32[144,128]{1,0:T(1,128)}', space=vmem, size = 0x12000, scoped, tag = 'internal scratch']
  %s0 = inlined_call_operand.hbm [shape: f32[8,2,512], index: 0, kind: input, shape index: {}]
  %s1 = inlined_call_operand.hbm [shape: f32[128,512], index: 1, kind: input, shape index: {}]
  %s2 = inlined_call_operand.hbm [shape: f32[8,2,128], index: 2, kind: output, shape index: {0}]
  %s3 = inlined_call_operand.hbm [shape: f32[2,128], index: 3, kind: output, shape index: {1}]
  %s4 = inlined_call_operand.hbm [shape: f32[2,128], index: 4, kind: output, shape index: {2}]
  %5 = xla_tuple %s2, %s3, %s4
  %s6 = sld [smem:[#allocation0]]
  $region46: #{tpu_custom_call.1} parent=0
    _
  %s8 = ssub.s32 1, %s6
  %s9 = scalar_select 0, %s8, %s6
  $region1: #{tpu_custom_call.1} parent=0
    #allocation2 [shape = 'u8[32768]{0}', space=vmem, size = 0x8000, scoped, tag = 'input window, operand 0, single buffered']
    #allocation3 [shape = 's32[1]{0}', space=sflag, size = 0x4, scoped, tag = 'scoped memory for tpu_custom_call.1']
    #allocation4 [shape = 's32[1]{0}', space=sflag, size = 0x4, scoped, tag = 'scoped memory for tpu_custom_call.1']
    #allocation5 [shape = 'u8[262144]{0}', space=vmem, size = 0x40000, scoped, tag = 'input window, operand 1, single buffered']
    #allocation6 [shape = 's32[1]{0}', space=sflag, size = 0x4, scoped, tag = 'scoped memory for tpu_custom_call.1']
    #allocation7 [shape = 'u8[8192]{0}', space=vmem, size = 0x2000, scoped, tag = 'output window, operand 0, single buffered']
    #allocation8 [shape = 'u8[1024]{0}', space=vmem, size = 0x400, scoped, tag = 'output window, operand 1, single buffered']
    #allocation9 [shape = 's32[1]{0}', space=sflag, size = 0x4, scoped, tag = 'scoped memory for tpu_custom_call.1']
    #allocation10 [shape = 'u8[1024]{0}', space=vmem, size = 0x400, scoped, tag = 'output window, operand 2, single buffered']
    %10 = vsyncpa [#allocation3], 0
    %11 = vsyncpa [#allocation6], 0
    %12 = vsyncpa [#allocation4], 0
    %13 = vsyncpa [#allocation9], 0
    // Predicated region
    $region2: #{tpu_custom_call.1} parent=1 // pred_check
      _
    $region3: #{tpu_custom_call.1} parent=1 // pred_check_branch
      %15 = sbr.rel (0) target = $region5
    $region4: #{tpu_custom_call.1} parent=1 // pred_region
      %s17 = ssub.s32 1024, 1024
      %18 = vsyncadd [#allocation3], %s17
      %s19 = sshll.u32 [#allocation2], 4
      %s20 = int_to_ptr.vmem [resolvable:$true] %s19
      %25 = dma.hbm_to_vmem [thread:$0]  %s0, 1024, %s20, [#allocation3], 128, 128, 8
    $region5: #{tpu_custom_call.1} parent=1 // pred_fallthru
      _
    // Predicated region
    $region6: #{tpu_custom_call.1} parent=1 // pred_check
      _
    $region7: #{tpu_custom_call.1} parent=1 // pred_check_branch
      %27 = sbr.rel (0) target = $region9
    $region8: #{tpu_custom_call.1} parent=1 // pred_region
      %s29 = ssub.s32 8192, 8192
      %30 = vsyncadd [#allocation6], %s29
      %s31 = sshll.u32 [#allocation5], 4
      %s32 = int_to_ptr.vmem [resolvable:$true] %s31
      %37 = dma.hbm_to_vmem [thread:$0]  %s1, 8192, %s32, [#allocation6], 512, 512, 32
    $region9: #{tpu_custom_call.1} parent=1 // pred_fallthru
      _
    // Predicated region
    $region10: #{tpu_custom_call.1} parent=1 // pred_check
      _
    $region11: #{tpu_custom_call.1} parent=1 // pred_check_branch
      %39 = sbr.rel (0) target = $region13
    $region12: #{tpu_custom_call.1} parent=1 // pred_region
      %40 = dma.done [#allocation3], 1024
    $region13: #{tpu_custom_call.1} parent=1 // pred_fallthru
      _
    // Predicated region
    $region14: #{tpu_custom_call.1} parent=1 // pred_check
      _
    $region15: #{tpu_custom_call.1} parent=1 // pred_check_branch
      %42 = sbr.rel (0) target = $region17
    $region16: #{tpu_custom_call.1} parent=1 // pred_region
      %43 = dma.done [#allocation6], 8192
    $region17: #{tpu_custom_call.1} parent=1 // pred_fallthru
      _
    %p44 = scmp.eq.s32.totalorder 0, 0
    // Predicated region
    $region18: #{tpu_custom_call.1} parent=1 // pred_check
      %p45 = pneg %p44
    $region19: #{tpu_custom_call.1} parent=1 // pred_check_branch
      %47 = sbr.rel (%p45) target = $region21
    $region20: #{tpu_custom_call.1} parent=1 // pred_region
      %48 = vst [vmem:[#allocation8] sm:$0x3] 0.0
      %49 = vst [vmem:[#allocation10] sm:$0x3] 0.0
    $region21: #{tpu_custom_call.1} parent=1 // pred_fallthru
      _
    %v50 = vld [vmem:[#allocation5] sm:$0xff]
    %v51 = vld [vmem:[#allocation5 + $0x8] sm:$0xff]
    %v52 = vld [vmem:[#allocation5 + $0x10] sm:$0xff]
    %v53 = vld [vmem:[#allocation5 + $0x18] sm:$0xff]
    %v54 = vld [vmem:[#allocation5 + $0x20] sm:$0xff]
    %v55 = vld [vmem:[#allocation5 + $0x28] sm:$0xff]
    %v56 = vld [vmem:[#allocation5 + $0x30] sm:$0xff]
    %v57 = vld [vmem:[#allocation5 + $0x38] sm:$0xff]
    %v58 = vld [vmem:[#allocation5 + $0x40] sm:$0xff]
    %v59 = vld [vmem:[#allocation5 + $0x48] sm:$0xff]
    %v60 = vld [vmem:[#allocation5 + $0x50] sm:$0xff]
    %v61 = vld [vmem:[#allocation5 + $0x58] sm:$0xff]
    %v62 = vld [vmem:[#allocation5 + $0x60] sm:$0xff]
    %v63 = vld [vmem:[#allocation5 + $0x68] sm:$0xff]
    %v64 = vld [vmem:[#allocation5 + $0x70] sm:$0xff]
    %v65 = vld [vmem:[#allocation5 + $0x78] sm:$0xff]
    %v66 = vld [vmem:[#allocation5 + $0x80] sm:$0xff]
    %v67 = vld [vmem:[#allocation5 + $0x88] sm:$0xff]
    %v68 = vld [vmem:[#allocation5 + $0x90] sm:$0xff]
    %v69 = vld [vmem:[#allocation5 + $0x98] sm:$0xff]
    %v70 = vld [vmem:[#allocation5 + $0xa0] sm:$0xff]
    %v71 = vld [vmem:[#allocation5 + $0xa8] sm:$0xff]
    %v72 = vld [vmem:[#allocation5 + $0xb0] sm:$0xff]
    %v73 = vld [vmem:[#allocation5 + $0xb8] sm:$0xff]
    %v74 = vld [vmem:[#allocation5 + $0xc0] sm:$0xff]
    %v75 = vld [vmem:[#allocation5 + $0xc8] sm:$0xff]
    %v76 = vld [vmem:[#allocation5 + $0xd0] sm:$0xff]
    %v77 = vld [vmem:[#allocation5 + $0xd8] sm:$0xff]
    %v78 = vld [vmem:[#allocation5 + $0xe0] sm:$0xff]
    %v79 = vld [vmem:[#allocation5 + $0xe8] sm:$0xff]
    %v80 = vld [vmem:[#allocation5 + $0xf0] sm:$0xff]
    %v81 = vld [vmem:[#allocation5 + $0xf8] sm:$0xff]
    %v82 = vld [vmem:[#allocation5 + $0x100] sm:$0xff]
    %v83 = vld [vmem:[#allocation5 + $0x108] sm:$0xff]
    %v84 = vld [vmem:[#allocation5 + $0x110] sm:$0xff]
    %v85 = vld [vmem:[#allocation5 + $0x118] sm:$0xff]
    %v86 = vld [vmem:[#allocation5 + $0x120] sm:$0xff]
    %v87 = vld [vmem:[#allocation5 + $0x128] sm:$0xff]
    %v88 = vld [vmem:[#allocation5 + $0x130] sm:$0xff]
    %v89 = vld [vmem:[#allocation5 + $0x138] sm:$0xff]
    %v90 = vld [vmem:[#allocation5 + $0x140] sm:$0xff]
    %v91 = vld [vmem:[#allocation5 + $0x148] sm:$0xff]
    %v92 = vld [vmem:[#allocation5 + $0x150] sm:$0xff]
    %v93 = vld [vmem:[#allocation5 + $0x158] sm:$0xff]
    %v94 = vld [vmem:[#allocation5 + $0x160] sm:$0xff]
    %v95 = vld [vmem:[#allocation5 + $0x168] sm:$0xff]
    %v96 = vld [vmem:[#allocation5 + $0x170] sm:$0xff]
    %v97 = vld [vmem:[#allocation5 + $0x178] sm:$0xff]
    %v98 = vld [vmem:[#allocation5 + $0x180] sm:$0xff]
    %v99 = vld [vmem:[#allocation5 + $0x188] sm:$0xff]
    %v100 = vld [vmem:[#allocation5 + $0x190] sm:$0xff]
    %v101 = vld [vmem:[#allocation5 + $0x198] sm:$0xff]
    %v102 = vld [vmem:[#allocation5 + $0x1a0] sm:$0xff]
    %v103 = vld [vmem:[#allocation5 + $0x1a8] sm:$0xff]
    %v104 = vld [vmem:[#allocation5 + $0x1b0] sm:$0xff]
    %v105 = vld [vmem:[#allocation5 + $0x1b8] sm:$0xff]
    %v106 = vld [vmem:[#allocation5 + $0x1c0] sm:$0xff]
    %v107 = vld [vmem:[#allocation5 + $0x1c8] sm:$0xff]
    %v108 = vld [vmem:[#allocation5 + $0x1d0] sm:$0xff]
    %v109 = vld [vmem:[#allocation5 + $0x1d8] sm:$0xff]
    %v110 = vld [vmem:[#allocation5 + $0x1e0] sm:$0xff]
    %v111 = vld [vmem:[#allocation5 + $0x1e8] sm:$0xff]
    %v112 = vld [vmem:[#allocation5 + $0x1f0] sm:$0xff]
    %v113 = vld [vmem:[#allocation5 + $0x1f8] sm:$0xff]
    %v114 = vld [vmem:[#allocation8] sm:$0x3]
    %v115 = vld [vmem:[#allocation10] sm:$0x3]
    %v116 = vld [vmem:[#allocation2] sm:$0xff]
    %117 = vmatprep.subr.mxu0 %v51
    %118 = vmatpush1.msra.mxu0 %v50
    %119 = vmatprep.subr.mxu0 %v55
    %120 = vmatpush1.msra.mxu0 %v54
    %121 = vmatprep.subr.mxu0 %v59
    %122 = vmatpush1.msra.mxu0 %v58
    %123 = vmatprep.subr.mxu0 %v63
    %124 = vmatpush1.msra.mxu0 %v62
    %125 = vmatprep.subr.mxu0 %v67
    %126 = vmatpush1.msra.mxu0 %v66
    %127 = vmatprep.subr.mxu0 %v71
    %128 = vmatpush1.msra.mxu0 %v70
    %129 = vmatprep.subr.mxu0 %v75
    %130 = vmatpush1.msra.mxu0 %v74
    %131 = vmatprep.subr.mxu0 %v79
    %132 = vmatpush1.msra.mxu0 %v78
    %133 = vmatprep.subr.mxu0 %v83
    %134 = vmatpush1.msra.mxu0 %v82
    %135 = vmatprep.subr.mxu0 %v87
    %136 = vmatpush1.msra.mxu0 %v86
    %137 = vmatprep.subr.mxu0 %v91
    %138 = vmatpush1.msra.mxu0 %v90
    %139 = vmatprep.subr.mxu0 %v95
    %140 = vmatpush1.msra.mxu0 %v94
    %141 = vmatprep.subr.mxu0 %v99
    %142 = vmatpush1.msra.mxu0 %v98
    %143 = vmatprep.subr.mxu0 %v103
    %144 = vmatpush1.msra.mxu0 %v102
    %145 = vmatprep.subr.mxu0 %v107
    %146 = vmatpush1.msra.mxu0 %v106
    %147 = vmatprep.subr.mxu0 %v111
    %148 = vmatpush1.msra.mxu0 %v110
    %149 = vmatprep.subr.mxu0 0.0
    %150 = vmatpush1.msra.mxu0 0.0
    %151 = vmatprep.subr.mxu0 0.0
    %152 = vmatpush1.msra.mxu0 0.0
    %153 = vmatprep.subr.mxu0 0.0
    %154 = vmatpush1.msra.mxu0 0.0
    %155 = vmatprep.subr.mxu0 0.0
    %156 = vmatpush1.msra.mxu0 0.0
    %157 = vmatprep.subr.mxu0 0.0
    %158 = vmatpush1.msra.mxu0 0.0
    %159 = vmatprep.subr.mxu0 0.0
    %160 = vmatpush1.msra.mxu0 0.0
    %161 = vmatprep.subr.mxu0 0.0
    %162 = vmatpush1.msra.mxu0 0.0
    %163 = vmatprep.subr.mxu0 0.0
    %164 = vmatpush1.msra.mxu0 0.0
    %165 = vmatprep.subr.mxu0 0.0
    %166 = vmatpush1.msra.mxu0 0.0
    %167 = vmatprep.subr.mxu0 0.0
    %168 = vmatpush1.msra.mxu0 0.0
    %169 = vmatprep.subr.mxu0 0.0
    %170 = vmatpush1.msra.mxu0 0.0
    %171 = vmatprep.subr.mxu0 0.0
    %172 = vmatpush1.msra.mxu0 0.0
    %173 = vmatprep.subr.mxu0 0.0
    %174 = vmatpush1.msra.mxu0 0.0
    %175 = vmatprep.subr.mxu0 0.0
    %176 = vmatpush1.msra.mxu0 0.0
    %177 = vmatprep.subr.mxu0 0.0
    %178 = vmatpush1.msra.mxu0 0.0
    %179 = vmatprep.subr.mxu0 0.0
    %180 = vmatpush1.msra.mxu0 0.0
    %181 = vmatprep.mubr.f32.mxu0 0.0
    %182 = vmatmul.mubr.f32.gmra.mrb[0].mxu0 %v114
    %v183 = vpop.f32.mrb[0].mxu0
    %v184 = vadd.f32 0.0, %v183
    %v185 = vpop.f32.mrb[0].mxu0
    %v186 = vadd.f32 0.0, %v185
    %187 = vdwg.mxu0
    %188 = vmatprep.subr.mxu0 %v53
    %189 = vmatpush1.msra.mxu0 %v52
    %190 = vmatprep.subr.mxu0 %v57
    %191 = vmatpush1.msra.mxu0 %v56
    %192 = vmatprep.subr.mxu0 %v61
    %193 = vmatpush1.msra.mxu0 %v60
    %194 = vmatprep.subr.mxu0 %v65
    %195 = vmatpush1.msra.mxu0 %v64
    %196 = vmatprep.subr.mxu0 %v69
    %197 = vmatpush1.msra.mxu0 %v68
    %198 = vmatprep.subr.mxu0 %v73
    %199 = vmatpush1.msra.mxu0 %v72
    %200 = vmatprep.subr.mxu0 %v77
    %201 = vmatpush1.msra.mxu0 %v76
    %202 = vmatprep.subr.mxu0 %v81
    %203 = vmatpush1.msra.mxu0 %v80
    %204 = vmatprep.subr.mxu0 %v85
    %205 = vmatpush1.msra.mxu0 %v84
    %206 = vmatprep.subr.mxu0 %v89
    %207 = vmatpush1.msra.mxu0 %v88
    %208 = vmatprep.subr.mxu0 %v93
    %209 = vmatpush1.msra.mxu0 %v92
    %210 = vmatprep.subr.mxu0 %v97
    %211 = vmatpush1.msra.mxu0 %v96
    %212 = vmatprep.subr.mxu0 %v101
    %213 = vmatpush1.msra.mxu0 %v100
    %214 = vmatprep.subr.mxu0 %v105
    %215 = vmatpush1.msra.mxu0 %v104
    %216 = vmatprep.subr.mxu0 %v109
    %217 = vmatpush1.msra.mxu0 %v108
    %218 = vmatprep.subr.mxu0 %v113
    %219 = vmatpush1.msra.mxu0 %v112
    %220 = vmatprep.subr.mxu0 0.0
    %221 = vmatpush1.msra.mxu0 0.0
    %222 = vmatprep.subr.mxu0 0.0
    %223 = vmatpush1.msra.mxu0 0.0
    %224 = vmatprep.subr.mxu0 0.0
    %225 = vmatpush1.msra.mxu0 0.0
    %226 = vmatprep.subr.mxu0 0.0
    %227 = vmatpush1.msra.mxu0 0.0
    %228 = vmatprep.subr.mxu0 0.0
    %229 = vmatpush1.msra.mxu0 0.0
    %230 = vmatprep.subr.mxu0 0.0
    %231 = vmatpush1.msra.mxu0 0.0
    %232 = vmatprep.subr.mxu0 0.0
    %233 = vmatpush1.msra.mxu0 0.0
    %234 = vmatprep.subr.mxu0 0.0
    %235 = vmatpush1.msra.mxu0 0.0
    %236 = vmatprep.subr.mxu0 0.0
    %237 = vmatpush1.msra.mxu0 0.0
    %238 = vmatprep.subr.mxu0 0.0
    %239 = vmatpush1.msra.mxu0 0.0
    %240 = vmatprep.subr.mxu0 0.0
    %241 = vmatpush1.msra.mxu0 0.0
    %242 = vmatprep.subr.mxu0 0.0
    %243 = vmatpush1.msra.mxu0 0.0
    %244 = vmatprep.subr.mxu0 0.0
    %245 = vmatpush1.msra.mxu0 0.0
    %246 = vmatprep.subr.mxu0 0.0
    %247 = vmatpush1.msra.mxu0 0.0
    %248 = vmatprep.subr.mxu0 0.0
    %249 = vmatpush1.msra.mxu0 0.0
    %250 = vmatprep.subr.mxu0 0.0
    %251 = vmatpush1.msra.mxu0 0.0
    %252 = vmatprep.mubr.f32.mxu0 0.0
    %253 = vmatmul.mubr.f32.gmra.mrb[0].mxu0 %v114
    %v254 = vpop.f32.mrb[0].mxu0
    %v255 = vadd.f32 0.0, %v254
    %v256 = vpop.f32.mrb[0].mxu0
    %v257 = vadd.f32 0.0, %v256
    %258 = vdwg.mxu0
    %v263 = vcombine.low %v184, %v186
    %v264 = vcombine.low %v255, %v257
    %v266 = vunpack.c.l.s4 1983009808
    %v267 = vunpack.c.0.s8 %v266
    %v268 = vlaneseq
    %v269 = vshrl.u32 %v268, 7
    %v270 = vsub.s32 %v267, %v269
    %v271 = vrot.slane %v263, %v270
    %v273 = vunpack.c.l.s4 1983009808
    %v274 = vunpack.c.0.s8 %v273
    %v275 = vlaneseq
    %v276 = vshrl.u32 %v275, 7
    %v277 = vsub.s32 %v274, %v276
    %v278 = vrot.slane %v264, %v277
    %v279 = vcombine.low %v271, %v278
    %v281 = vadd.f32 %v116, %v279
    %v282 = vmul.f32 %v281, 0.5
    %v283 = vtanh.pop %v282
    %v284 = vmul.f32 %v283, 0.5
    %v285 = vadd.f32 %v284, 0.5
    %v287 = vrot.slane %v281, 2
    %v289 = vmul.f32 %v287, 0.5
    %v290 = vtanh.pop %v289
    %v291 = vmul.f32 %v290, 0.5
    %v292 = vadd.f32 %v291, 0.5
    %v293 = vrot.slane %v281, 4
    %v295 = vtanh.pop %v293
    %v296 = vrot.slane %v281, 6
    %v298 = vmul.f32 %v296, 0.5
    %v299 = vtanh.pop %v298
    %v300 = vmul.f32 %v299, 0.5
    %v301 = vadd.f32 %v300, 0.5
    %v302 = vmul.f32 %v292, %v115
    %v303 = vmul.f32 %v285, %v295
    %v304 = vadd.f32 %v302, %v303
    %v305 = vtanh.pop %v304
    %v306 = vmul.f32 %v301, %v305
    %307 = vst [vmem:[#allocation10] sm:$0x3] %v304
    %308 = vst [vmem:[#allocation8] sm:$0x3] %v306
    %309 = vst [vmem:[#allocation7] sm:$0x3] %v306
    %v310 = vld [vmem:[#allocation8] sm:$0x3]
    %v311 = vld [vmem:[#allocation10] sm:$0x3]
    %s312 = scalar_lea.vmem [#allocation2], 8
    %v313 = vld [vmem:[%s312] sm:$0xff]
    %314 = vmatprep.subr.mxu0 %v51
    %315 = vmatpush1.msra.mxu0 %v50
    %316 = vmatprep.subr.mxu0 %v55
    %317 = vmatpush1.msra.mxu0 %v54
    %318 = vmatprep.subr.mxu0 %v59
    %319 = vmatpush1.msra.mxu0 %v58
    %320 = vmatprep.subr.mxu0 %v63
    %321 = vmatpush1.msra.mxu0 %v62
    %322 = vmatprep.subr.mxu0 %v67
    %323 = vmatpush1.msra.mxu0 %v66
    %324 = vmatprep.subr.mxu0 %v71
    %325 = vmatpush1.msra.mxu0 %v70
    %326 = vmatprep.subr.mxu0 %v75
    %327 = vmatpush1.msra.mxu0 %v74
    %328 = vmatprep.subr.mxu0 %v79
    %329 = vmatpush1.msra.mxu0 %v78
    %330 = vmatprep.subr.mxu0 %v83
    %331 = vmatpush1.msra.mxu0 %v82
    %332 = vmatprep.subr.mxu0 %v87
    %333 = vmatpush1.msra.mxu0 %v86
    %334 = vmatprep.subr.mxu0 %v91
    %335 = vmatpush1.msra.mxu0 %v90
    %336 = vmatprep.subr.mxu0 %v95
    %337 = vmatpush1.msra.mxu0 %v94
    %338 = vmatprep.subr.mxu0 %v99
    %339 = vmatpush1.msra.mxu0 %v98
    %340 = vmatprep.subr.mxu0 %v103
    %341 = vmatpush1.msra.mxu0 %v102
    %342 = vmatprep.subr.mxu0 %v107
    %343 = vmatpush1.msra.mxu0 %v106
    %344 = vmatprep.subr.mxu0 %v111
    %345 = vmatpush1.msra.mxu0 %v110
    %346 = vmatprep.subr.mxu0 0.0
    %347 = vmatpush1.msra.mxu0 0.0
    %348 = vmatprep.subr.mxu0 0.0
    %349 = vmatpush1.msra.mxu0 0.0
    %350 = vmatprep.subr.mxu0 0.0
    %351 = vmatpush1.msra.mxu0 0.0
    %352 = vmatprep.subr.mxu0 0.0
    %353 = vmatpush1.msra.mxu0 0.0
    %354 = vmatprep.subr.mxu0 0.0
    %355 = vmatpush1.msra.mxu0 0.0
    %356 = vmatprep.subr.mxu0 0.0
    %357 = vmatpush1.msra.mxu0 0.0
    %358 = vmatprep.subr.mxu0 0.0
    %359 = vmatpush1.msra.mxu0 0.0
    %360 = vmatprep.subr.mxu0 0.0
    %361 = vmatpush1.msra.mxu0 0.0
    %362 = vmatprep.subr.mxu0 0.0
    %363 = vmatpush1.msra.mxu0 0.0
    %364 = vmatprep.subr.mxu0 0.0
    %365 = vmatpush1.msra.mxu0 0.0
    %366 = vmatprep.subr.mxu0 0.0
    %367 = vmatpush1.msra.mxu0 0.0
    %368 = vmatprep.subr.mxu0 0.0
    %369 = vmatpush1.msra.mxu0 0.0
    %370 = vmatprep.subr.mxu0 0.0
    %371 = vmatpush1.msra.mxu0 0.0
    %372 = vmatprep.subr.mxu0 0.0
    %373 = vmatpush1.msra.mxu0 0.0
    %374 = vmatprep.subr.mxu0 0.0
    %375 = vmatpush1.msra.mxu0 0.0
    %376 = vmatprep.subr.mxu0 0.0
    %377 = vmatpush1.msra.mxu0 0.0
    %378 = vmatprep.mubr.f32.mxu0 0.0
    %379 = vmatmul.mubr.f32.gmra.mrb[0].mxu0 %v310
    %v380 = vpop.f32.mrb[0].mxu0
    %v381 = vadd.f32 0.0, %v380
    %v382 = vpop.f32.mrb[0].mxu0
    %v383 = vadd.f32 0.0, %v382
    %384 = vdwg.mxu0
    %385 = vmatprep.subr.mxu0 %v53
    %386 = vmatpush1.msra.mxu0 %v52
    %387 = vmatprep.subr.mxu0 %v57
    %388 = vmatpush1.msra.mxu0 %v56
    %389 = vmatprep.subr.mxu0 %v61
    %390 = vmatpush1.msra.mxu0 %v60
    %391 = vmatprep.subr.mxu0 %v65
    %392 = vmatpush1.msra.mxu0 %v64
    %393 = vmatprep.subr.mxu0 %v69
    %394 = vmatpush1.msra.mxu0 %v68
    %395 = vmatprep.subr.mxu0 %v73
    %396 = vmatpush1.msra.mxu0 %v72
    %397 = vmatprep.subr.mxu0 %v77
    %398 = vmatpush1.msra.mxu0 %v76
    %399 = vmatprep.subr.mxu0 %v81
    %400 = vmatpush1.msra.mxu0 %v80
    %401 = vmatprep.subr.mxu0 %v85
    %402 = vmatpush1.msra.mxu0 %v84
    %403 = vmatprep.subr.mxu0 %v89
    %404 = vmatpush1.msra.mxu0 %v88
    %405 = vmatprep.subr.mxu0 %v93
    %406 = vmatpush1.msra.mxu0 %v92
    %407 = vmatprep.subr.mxu0 %v97
    %408 = vmatpush1.msra.mxu0 %v96
    %409 = vmatprep.subr.mxu0 %v101
    %410 = vmatpush1.msra.mxu0 %v100
    %411 = vmatprep.subr.mxu0 %v105
    %412 = vmatpush1.msra.mxu0 %v104
    %413 = vmatprep.subr.mxu0 %v109
    %414 = vmatpush1.msra.mxu0 %v108
    %415 = vmatprep.subr.mxu0 %v113
    %416 = vmatpush1.msra.mxu0 %v112
    %417 = vmatprep.subr.mxu0 0.0
    %418 = vmatpush1.msra.mxu0 0.0
    %419 = vmatprep.subr.mxu0 0.0
    %420 = vmatpush1.msra.mxu0 0.0
    %421 = vmatprep.subr.mxu0 0.0
    %422 = vmatpush1.msra.mxu0 0.0
    %423 = vmatprep.subr.mxu0 0.0
    %424 = vmatpush1.msra.mxu0 0.0
    %425 = vmatprep.subr.mxu0 0.0
    %426 = vmatpush1.msra.mxu0 0.0
    %427 = vmatprep.subr.mxu0 0.0
    %428 = vmatpush1.msra.mxu0 0.0
    %429 = vmatprep.subr.mxu0 0.0
    %430 = vmatpush1.msra.mxu0 0.0
    %431 = vmatprep.subr.mxu0 0.0
    %432 = vmatpush1.msra.mxu0 0.0
    %433 = vmatprep.subr.mxu0 0.0
    %434 = vmatpush1.msra.mxu0 0.0
    %435 = vmatprep.subr.mxu0 0.0
    %436 = vmatpush1.msra.mxu0 0.0
    %437 = vmatprep.subr.mxu0 0.0
    %438 = vmatpush1.msra.mxu0 0.0
    %439 = vmatprep.subr.mxu0 0.0
    %440 = vmatpush1.msra.mxu0 0.0
    %441 = vmatprep.subr.mxu0 0.0
    %442 = vmatpush1.msra.mxu0 0.0
    %443 = vmatprep.subr.mxu0 0.0
    %444 = vmatpush1.msra.mxu0 0.0
    %445 = vmatprep.subr.mxu0 0.0
    %446 = vmatpush1.msra.mxu0 0.0
    %447 = vmatprep.subr.mxu0 0.0
    %448 = vmatpush1.msra.mxu0 0.0
    %449 = vmatprep.mubr.f32.mxu0 0.0
    %450 = vmatmul.mubr.f32.gmra.mrb[0].mxu0 %v310
    %v451 = vpop.f32.mrb[0].mxu0
    %v452 = vadd.f32 0.0, %v451
    %v453 = vpop.f32.mrb[0].mxu0
    %v454 = vadd.f32 0.0, %v453
    %455 = vdwg.mxu0
    %v460 = vcombine.low %v381, %v383
    %v461 = vcombine.low %v452, %v454
    %v463 = vunpack.c.l.s4 1983009808
    %v464 = vunpack.c.0.s8 %v463
    %v465 = vlaneseq
    %v466 = vshrl.u32 %v465, 7
    %v467 = vsub.s32 %v464, %v466
    %v468 = vrot.slane %v460, %v467
    %v470 = vunpack.c.l.s4 1983009808
    %v471 = vunpack.c.0.s8 %v470
    %v472 = vlaneseq
    %v473 = vshrl.u32 %v472, 7
    %v474 = vsub.s32 %v471, %v473
    %v475 = vrot.slane %v461, %v474
    %v476 = vcombine.low %v468, %v475
    %v478 = vadd.f32 %v313, %v476
    %v479 = vmul.f32 %v478, 0.5
    %v480 = vtanh.pop %v479
    %v481 = vmul.f32 %v480, 0.5
    %v482 = vadd.f32 %v481, 0.5
    %v484 = vrot.slane %v478, 2
    %v486 = vmul.f32 %v484, 0.5
    %v487 = vtanh.pop %v486
    %v488 = vmul.f32 %v487, 0.5
    %v489 = vadd.f32 %v488, 0.5
    %v490 = vrot.slane %v478, 4
    %v492 = vtanh.pop %v490
    %v493 = vrot.slane %v478, 6
    %v495 = vmul.f32 %v493, 0.5
    %v496 = vtanh.pop %v495
    %v497 = vmul.f32 %v496, 0.5
    %v498 = vadd.f32 %v497, 0.5
    %v499 = vmul.f32 %v489, %v311
    %v500 = vmul.f32 %v482, %v492
    %v501 = vadd.f32 %v499, %v500
    %v502 = vtanh.pop %v501
    %v503 = vmul.f32 %v498, %v502
    %504 = vst [vmem:[#allocation10] sm:$0x3] %v501
    %505 = vst [vmem:[#allocation8] sm:$0x3] %v503
    %s506 = scalar_lea.vmem [#allocation7], 2
    %507 = vst [vmem:[%s506] sm:$0x3] %v503
    %v508 = vld [vmem:[#allocation8] sm:$0x3]
    %v509 = vld [vmem:[#allocation10] sm:$0x3]
    %s510 = scalar_lea.vmem [#allocation2], 16
    %v511 = vld [vmem:[%s510] sm:$0xff]
    %512 = vmatprep.subr.mxu0 %v51
    %513 = vmatpush1.msra.mxu0 %v50
    %514 = vmatprep.subr.mxu0 %v55
    %515 = vmatpush1.msra.mxu0 %v54
    %516 = vmatprep.subr.mxu0 %v59
    %517 = vmatpush1.msra.mxu0 %v58
    %518 = vmatprep.subr.mxu0 %v63
    %519 = vmatpush1.msra.mxu0 %v62
    %520 = vmatprep.subr.mxu0 %v67
    %521 = vmatpush1.msra.mxu0 %v66
    %522 = vmatprep.subr.mxu0 %v71
    %523 = vmatpush1.msra.mxu0 %v70
    %524 = vmatprep.subr.mxu0 %v75
    %525 = vmatpush1.msra.mxu0 %v74
    %526 = vmatprep.subr.mxu0 %v79
    %527 = vmatpush1.msra.mxu0 %v78
    %528 = vmatprep.subr.mxu0 %v83
    %529 = vmatpush1.msra.mxu0 %v82
    %530 = vmatprep.subr.mxu0 %v87
    %531 = vmatpush1.msra.mxu0 %v86
    %532 = vmatprep.subr.mxu0 %v91
    %533 = vmatpush1.msra.mxu0 %v90
    %534 = vmatprep.subr.mxu0 %v95
    %535 = vmatpush1.msra.mxu0 %v94
    %536 = vmatprep.subr.mxu0 %v99
    %537 = vmatpush1.msra.mxu0 %v98
    %538 = vmatprep.subr.mxu0 %v103
    %539 = vmatpush1.msra.mxu0 %v102
    %540 = vmatprep.subr.mxu0 %v107
    %541 = vmatpush1.msra.mxu0 %v106
    %542 = vmatprep.subr.mxu0 %v111
    %543 = vmatpush1.msra.mxu0 %v110
    %544 = vmatprep.subr.mxu0 0.0
    %545 = vmatpush1.msra.mxu0 0.0
    %546 = vmatprep.subr.mxu0 0.0
    %547 = vmatpush1.msra.mxu0 0.0
    %548 = vmatprep.subr.mxu0 0.0
    %549 = vmatpush1.msra.mxu0 0.0
    %550 = vmatprep.subr.mxu0 0.0
    %551 = vmatpush1.msra.mxu0 0.0
    %552 = vmatprep.subr.mxu0 0.0
    %553 = vmatpush1.msra.mxu0 0.0
    %554 = vmatprep.subr.mxu0 0.0
    %555 = vmatpush1.msra.mxu0 0.0
    %556 = vmatprep.subr.mxu0 0.0
    %557 = vmatpush1.msra.mxu0 0.0
    %558 = vmatprep.subr.mxu0 0.0
    %559 = vmatpush1.msra.mxu0 0.0
    %560 = vmatprep.subr.mxu0 0.0
    %561 = vmatpush1.msra.mxu0 0.0
    %562 = vmatprep.subr.mxu0 0.0
    %563 = vmatpush1.msra.mxu0 0.0
    %564 = vmatprep.subr.mxu0 0.0
    %565 = vmatpush1.msra.mxu0 0.0
    %566 = vmatprep.subr.mxu0 0.0
    %567 = vmatpush1.msra.mxu0 0.0
    %568 = vmatprep.subr.mxu0 0.0
    %569 = vmatpush1.msra.mxu0 0.0
    %570 = vmatprep.subr.mxu0 0.0
    %571 = vmatpush1.msra.mxu0 0.0
    %572 = vmatprep.subr.mxu0 0.0
    %573 = vmatpush1.msra.mxu0 0.0
    %574 = vmatprep.subr.mxu0 0.0
    %575 = vmatpush1.msra.mxu0 0.0
    %576 = vmatprep.mubr.f32.mxu0 0.0
    %577 = vmatmul.mubr.f32.gmra.mrb[0].mxu0 %v508
    %v578 = vpop.f32.mrb[0].mxu0
    %v579 = vadd.f32 0.0, %v578
    %v580 = vpop.f32.mrb[0].mxu0
    %v581 = vadd.f32 0.0, %v580
    %582 = vdwg.mxu0
    %583 = vmatprep.subr.mxu0 %v53
    %584 = vmatpush1.msra.mxu0 %v52
    %585 = vmatprep.subr.mxu0 %v57
    %586 = vmatpush1.msra.mxu0 %v56
    %587 = vmatprep.subr.mxu0 %v61
    %588 = vmatpush1.msra.mxu0 %v60
    %589 = vmatprep.subr.mxu0 %v65
    %590 = vmatpush1.msra.mxu0 %v64
    %591 = vmatprep.subr.mxu0 %v69
    %592 = vmatpush1.msra.mxu0 %v68
    %593 = vmatprep.subr.mxu0 %v73
    %594 = vmatpush1.msra.mxu0 %v72
    %595 = vmatprep.subr.mxu0 %v77
    %596 = vmatpush1.msra.mxu0 %v76
    %597 = vmatprep.subr.mxu0 %v81
    %598 = vmatpush1.msra.mxu0 %v80
    %599 = vmatprep.subr.mxu0 %v85
    %600 = vmatpush1.msra.mxu0 %v84
    %601 = vmatprep.subr.mxu0 %v89
    %602 = vmatpush1.msra.mxu0 %v88
    %603 = vmatprep.subr.mxu0 %v93
    %604 = vmatpush1.msra.mxu0 %v92
    %605 = vmatprep.subr.mxu0 %v97
    %606 = vmatpush1.msra.mxu0 %v96
    %607 = vmatprep.subr.mxu0 %v101
    %608 = vmatpush1.msra.mxu0 %v100
    %609 = vmatprep.subr.mxu0 %v105
    %610 = vmatpush1.msra.mxu0 %v104
    %611 = vmatprep.subr.mxu0 %v109
    %612 = vmatpush1.msra.mxu0 %v108
    %613 = vmatprep.subr.mxu0 %v113
    %614 = vmatpush1.msra.mxu0 %v112
    %615 = vmatprep.subr.mxu0 0.0
    %616 = vmatpush1.msra.mxu0 0.0
    %617 = vmatprep.subr.mxu0 0.0
    %618 = vmatpush1.msra.mxu0 0.0
    %619 = vmatprep.subr.mxu0 0.0
    %620 = vmatpush1.msra.mxu0 0.0
    %621 = vmatprep.subr.mxu0 0.0
    %622 = vmatpush1.msra.mxu0 0.0
    %623 = vmatprep.subr.mxu0 0.0
    %624 = vmatpush1.msra.mxu0 0.0
    %625 = vmatprep.subr.mxu0 0.0
    %626 = vmatpush1.msra.mxu0 0.0
    %627 = vmatprep.subr.mxu0 0.0
    %628 = vmatpush1.msra.mxu0 0.0
    %629 = vmatprep.subr.mxu0 0.0
    %630 = vmatpush1.msra.mxu0 0.0
    %631 = vmatprep.subr.mxu0 0.0
    %632 = vmatpush1.msra.mxu0 0.0
    %633 = vmatprep.subr.mxu0 0.0
    %634 = vmatpush1.msra.mxu0 0.0
    %635 = vmatprep.subr.mxu0 0.0
    %636 = vmatpush1.msra.mxu0 0.0
    %637 = vmatprep.subr.mxu0 0.0
    %638 = vmatpush1.msra.mxu0 0.0
    %639 = vmatprep.subr.mxu0 0.0
    %640 = vmatpush1.msra.mxu0 0.0
    %641 = vmatprep.subr.mxu0 0.0
    %642 = vmatpush1.msra.mxu0 0.0
    %643 = vmatprep.subr.mxu0 0.0
    %644 = vmatpush1.msra.mxu0 0.0
    %645 = vmatprep.subr.mxu0 0.0
    %646 = vmatpush1.msra.mxu0 0.0
    %647 = vmatprep.mubr.f32.mxu0 0.0
    %648 = vmatmul.mubr.f32.gmra.mrb[0].mxu0 %v508
    %v649 = vpop.f32.mrb[0].mxu0
    %v650 = vadd.f32 0.0, %v649
    %v651 = vpop.f32.mrb[0].mxu0
    %v652 = vadd.f32 0.0, %v651
    %653 = vdwg.mxu0
    %v658 = vcombine.low %v579, %v581
    %v659 = vcombine.low %v650, %v652
    %v661 = vunpack.c.l.s4 1983009808
    %v662 = vunpack.c.0.s8 %v661
    %v663 = vlaneseq
    %v664 = vshrl.u32 %v663, 7
    %v665 = vsub.s32 %v662, %v664
    %v666 = vrot.slane %v658, %v665
    %v668 = vunpack.c.l.s4 1983009808
    %v669 = vunpack.c.0.s8 %v668
    %v670 = vlaneseq
    %v671 = vshrl.u32 %v670, 7
    %v672 = vsub.s32 %v669, %v671
    %v673 = vrot.slane %v659, %v672
    %v674 = vcombine.low %v666, %v673
    %v676 = vadd.f32 %v511, %v674
    %v677 = vmul.f32 %v676, 0.5
    %v678 = vtanh.pop %v677
    %v679 = vmul.f32 %v678, 0.5
    %v680 = vadd.f32 %v679, 0.5
    %v682 = vrot.slane %v676, 2
    %v684 = vmul.f32 %v682, 0.5
    %v685 = vtanh.pop %v684
    %v686 = vmul.f32 %v685, 0.5
    %v687 = vadd.f32 %v686, 0.5
    %v688 = vrot.slane %v676, 4
    %v690 = vtanh.pop %v688
    %v691 = vrot.slane %v676, 6
    %v693 = vmul.f32 %v691, 0.5
    %v694 = vtanh.pop %v693
    %v695 = vmul.f32 %v694, 0.5
    %v696 = vadd.f32 %v695, 0.5
    %v697 = vmul.f32 %v687, %v509
    %v698 = vmul.f32 %v680, %v690
    %v699 = vadd.f32 %v697, %v698
    %v700 = vtanh.pop %v699
    %v701 = vmul.f32 %v696, %v700
    %702 = vst [vmem:[#allocation10] sm:$0x3] %v699
    %703 = vst [vmem:[#allocation8] sm:$0x3] %v701
    %s704 = scalar_lea.vmem [#allocation7], 4
    %705 = vst [vmem:[%s704] sm:$0x3] %v701
    %v706 = vld [vmem:[#allocation8] sm:$0x3]
    %v707 = vld [vmem:[#allocation10] sm:$0x3]
    %s708 = scalar_lea.vmem [#allocation2], 24
    %v709 = vld [vmem:[%s708] sm:$0xff]
    %710 = vmatprep.subr.mxu0 %v51
    %711 = vmatpush1.msra.mxu0 %v50
    %712 = vmatprep.subr.mxu0 %v55
    %713 = vmatpush1.msra.mxu0 %v54
    %714 = vmatprep.subr.mxu0 %v59
    %715 = vmatpush1.msra.mxu0 %v58
    %716 = vmatprep.subr.mxu0 %v63
    %717 = vmatpush1.msra.mxu0 %v62
    %718 = vmatprep.subr.mxu0 %v67
    %719 = vmatpush1.msra.mxu0 %v66
    %720 = vmatprep.subr.mxu0 %v71
    %721 = vmatpush1.msra.mxu0 %v70
    %722 = vmatprep.subr.mxu0 %v75
    %723 = vmatpush1.msra.mxu0 %v74
    %724 = vmatprep.subr.mxu0 %v79
    %725 = vmatpush1.msra.mxu0 %v78
    %726 = vmatprep.subr.mxu0 %v83
    %727 = vmatpush1.msra.mxu0 %v82
    %728 = vmatprep.subr.mxu0 %v87
    %729 = vmatpush1.msra.mxu0 %v86
    %730 = vmatprep.subr.mxu0 %v91
    %731 = vmatpush1.msra.mxu0 %v90
    %732 = vmatprep.subr.mxu0 %v95
    %733 = vmatpush1.msra.mxu0 %v94
    %734 = vmatprep.subr.mxu0 %v99
    %735 = vmatpush1.msra.mxu0 %v98
    %736 = vmatprep.subr.mxu0 %v103
    %737 = vmatpush1.msra.mxu0 %v102
    %738 = vmatprep.subr.mxu0 %v107
    %739 = vmatpush1.msra.mxu0 %v106
    %740 = vmatprep.subr.mxu0 %v111
    %741 = vmatpush1.msra.mxu0 %v110
    %742 = vmatprep.subr.mxu0 0.0
    %743 = vmatpush1.msra.mxu0 0.0
    %744 = vmatprep.subr.mxu0 0.0
    %745 = vmatpush1.msra.mxu0 0.0
    %746 = vmatprep.subr.mxu0 0.0
    %747 = vmatpush1.msra.mxu0 0.0
    %748 = vmatprep.subr.mxu0 0.0
    %749 = vmatpush1.msra.mxu0 0.0
    %750 = vmatprep.subr.mxu0 0.0
    %751 = vmatpush1.msra.mxu0 0.0
    %752 = vmatprep.subr.mxu0 0.0
    %753 = vmatpush1.msra.mxu0 0.0
    %754 = vmatprep.subr.mxu0 0.0
    %755 = vmatpush1.msra.mxu0 0.0
    %756 = vmatprep.subr.mxu0 0.0
    %757 = vmatpush1.msra.mxu0 0.0
    %758 = vmatprep.subr.mxu0 0.0
    %759 = vmatpush1.msra.mxu0 0.0
    %760 = vmatprep.subr.mxu0 0.0
    %761 = vmatpush1.msra.mxu0 0.0
    %762 = vmatprep.subr.mxu0 0.0
    %763 = vmatpush1.msra.mxu0 0.0
    %764 = vmatprep.subr.mxu0 0.0
    %765 = vmatpush1.msra.mxu0 0.0
    %766 = vmatprep.subr.mxu0 0.0
    %767 = vmatpush1.msra.mxu0 0.0
    %768 = vmatprep.subr.mxu0 0.0
    %769 = vmatpush1.msra.mxu0 0.0
    %770 = vmatprep.subr.mxu0 0.0
    %771 = vmatpush1.msra.mxu0 0.0
    %772 = vmatprep.subr.mxu0 0.0
    %773 = vmatpush1.msra.mxu0 0.0
    %774 = vmatprep.mubr.f32.mxu0 0.0
    %775 = vmatmul.mubr.f32.gmra.mrb[0].mxu0 %v706
    %v776 = vpop.f32.mrb[0].mxu0
    %v777 = vadd.f32 0.0, %v776
    %v778 = vpop.f32.mrb[0].mxu0
    %v779 = vadd.f32 0.0, %v778
    %780 = vdwg.mxu0
    %781 = vmatprep.subr.mxu0 %v53
    %782 = vmatpush1.msra.mxu0 %v52
    %783 = vmatprep.subr.mxu0 %v57
    %784 = vmatpush1.msra.mxu0 %v56
    %785 = vmatprep.subr.mxu0 %v61
    %786 = vmatpush1.msra.mxu0 %v60
    %787 = vmatprep.subr.mxu0 %v65
    %788 = vmatpush1.msra.mxu0 %v64
    %789 = vmatprep.subr.mxu0 %v69
    %790 = vmatpush1.msra.mxu0 %v68
    %791 = vmatprep.subr.mxu0 %v73
    %792 = vmatpush1.msra.mxu0 %v72
    %793 = vmatprep.subr.mxu0 %v77
    %794 = vmatpush1.msra.mxu0 %v76
    %795 = vmatprep.subr.mxu0 %v81
    %796 = vmatpush1.msra.mxu0 %v80
    %797 = vmatprep.subr.mxu0 %v85
    %798 = vmatpush1.msra.mxu0 %v84
    %799 = vmatprep.subr.mxu0 %v89
    %800 = vmatpush1.msra.mxu0 %v88
    %801 = vmatprep.subr.mxu0 %v93
    %802 = vmatpush1.msra.mxu0 %v92
    %803 = vmatprep.subr.mxu0 %v97
    %804 = vmatpush1.msra.mxu0 %v96
    %805 = vmatprep.subr.mxu0 %v101
    %806 = vmatpush1.msra.mxu0 %v100
    %807 = vmatprep.subr.mxu0 %v105
    %808 = vmatpush1.msra.mxu0 %v104
    %809 = vmatprep.subr.mxu0 %v109
    %810 = vmatpush1.msra.mxu0 %v108
    %811 = vmatprep.subr.mxu0 %v113
    %812 = vmatpush1.msra.mxu0 %v112
    %813 = vmatprep.subr.mxu0 0.0
    %814 = vmatpush1.msra.mxu0 0.0
    %815 = vmatprep.subr.mxu0 0.0
    %816 = vmatpush1.msra.mxu0 0.0
    %817 = vmatprep.subr.mxu0 0.0
    %818 = vmatpush1.msra.mxu0 0.0
    %819 = vmatprep.subr.mxu0 0.0
    %820 = vmatpush1.msra.mxu0 0.0
    %821 = vmatprep.subr.mxu0 0.0
    %822 = vmatpush1.msra.mxu0 0.0
    %823 = vmatprep.subr.mxu0 0.0
    %824 = vmatpush1.msra.mxu0 0.0
    %825 = vmatprep.subr.mxu0 0.0
    %826 = vmatpush1.msra.mxu0 0.0
    %827 = vmatprep.subr.mxu0 0.0
    %828 = vmatpush1.msra.mxu0 0.0
    %829 = vmatprep.subr.mxu0 0.0
    %830 = vmatpush1.msra.mxu0 0.0
    %831 = vmatprep.subr.mxu0 0.0
    %832 = vmatpush1.msra.mxu0 0.0
    %833 = vmatprep.subr.mxu0 0.0
    %834 = vmatpush1.msra.mxu0 0.0
    %835 = vmatprep.subr.mxu0 0.0
    %836 = vmatpush1.msra.mxu0 0.0
    %837 = vmatprep.subr.mxu0 0.0
    %838 = vmatpush1.msra.mxu0 0.0
    %839 = vmatprep.subr.mxu0 0.0
    %840 = vmatpush1.msra.mxu0 0.0
    %841 = vmatprep.subr.mxu0 0.0
    %842 = vmatpush1.msra.mxu0 0.0
    %843 = vmatprep.subr.mxu0 0.0
    %844 = vmatpush1.msra.mxu0 0.0
    %845 = vmatprep.mubr.f32.mxu0 0.0
    %846 = vmatmul.mubr.f32.gmra.mrb[0].mxu0 %v706
    %v847 = vpop.f32.mrb[0].mxu0
    %v848 = vadd.f32 0.0, %v847
    %v849 = vpop.f32.mrb[0].mxu0
    %v850 = vadd.f32 0.0, %v849
    %851 = vdwg.mxu0
    %v856 = vcombine.low %v777, %v779
    %v857 = vcombine.low %v848, %v850
    %v859 = vunpack.c.l.s4 1983009808
    %v860 = vunpack.c.0.s8 %v859
    %v861 = vlaneseq
    %v862 = vshrl.u32 %v861, 7
    %v863 = vsub.s32 %v860, %v862
    %v864 = vrot.slane %v856, %v863
    %v866 = vunpack.c.l.s4 1983009808
    %v867 = vunpack.c.0.s8 %v866
    %v868 = vlaneseq
    %v869 = vshrl.u32 %v868, 7
    %v870 = vsub.s32 %v867, %v869
    %v871 = vrot.slane %v857, %v870
    %v872 = vcombine.low %v864, %v871
    %v874 = vadd.f32 %v709, %v872
    %v875 = vmul.f32 %v874, 0.5
    %v876 = vtanh.pop %v875
    %v877 = vmul.f32 %v876, 0.5
    %v878 = vadd.f32 %v877, 0.5
    %v880 = vrot.slane %v874, 2
    %v882 = vmul.f32 %v880, 0.5
    %v883 = vtanh.pop %v882
    %v884 = vmul.f32 %v883, 0.5
    %v885 = vadd.f32 %v884, 0.5
    %v886 = vrot.slane %v874, 4
    %v888 = vtanh.pop %v886
    %v889 = vrot.slane %v874, 6
    %v891 = vmul.f32 %v889, 0.5
    %v892 = vtanh.pop %v891
    %v893 = vmul.f32 %v892, 0.5
    %v894 = vadd.f32 %v893, 0.5
    %v895 = vmul.f32 %v885, %v707
    %v896 = vmul.f32 %v878, %v888
    %v897 = vadd.f32 %v895, %v896
    %v898 = vtanh.pop %v897
    %v899 = vmul.f32 %v894, %v898
    %900 = vst [vmem:[#allocation10] sm:$0x3] %v897
    %901 = vst [vmem:[#allocation8] sm:$0x3] %v899
    %s902 = scalar_lea.vmem [#allocation7], 6
    %903 = vst [vmem:[%s902] sm:$0x3] %v899
    %v904 = vld [vmem:[#allocation8] sm:$0x3]
    %v905 = vld [vmem:[#allocation10] sm:$0x3]
    %s906 = scalar_lea.vmem [#allocation2], 32
    %v907 = vld [vmem:[%s906] sm:$0xff]
    %908 = vmatprep.subr.mxu0 %v51
    %909 = vmatpush1.msra.mxu0 %v50
    %910 = vmatprep.subr.mxu0 %v55
    %911 = vmatpush1.msra.mxu0 %v54
    %912 = vmatprep.subr.mxu0 %v59
    %913 = vmatpush1.msra.mxu0 %v58
    %914 = vmatprep.subr.mxu0 %v63
    %915 = vmatpush1.msra.mxu0 %v62
    %916 = vmatprep.subr.mxu0 %v67
    %917 = vmatpush1.msra.mxu0 %v66
    %918 = vmatprep.subr.mxu0 %v71
    %919 = vmatpush1.msra.mxu0 %v70
    %920 = vmatprep.subr.mxu0 %v75
    %921 = vmatpush1.msra.mxu0 %v74
    %922 = vmatprep.subr.mxu0 %v79
    %923 = vmatpush1.msra.mxu0 %v78
    %924 = vmatprep.subr.mxu0 %v83
    %925 = vmatpush1.msra.mxu0 %v82
    %926 = vmatprep.subr.mxu0 %v87
    %927 = vmatpush1.msra.mxu0 %v86
    %928 = vmatprep.subr.mxu0 %v91
    %929 = vmatpush1.msra.mxu0 %v90
    %930 = vmatprep.subr.mxu0 %v95
    %931 = vmatpush1.msra.mxu0 %v94
    %932 = vmatprep.subr.mxu0 %v99
    %933 = vmatpush1.msra.mxu0 %v98
    %934 = vmatprep.subr.mxu0 %v103
    %935 = vmatpush1.msra.mxu0 %v102
    %936 = vmatprep.subr.mxu0 %v107
    %937 = vmatpush1.msra.mxu0 %v106
    %938 = vmatprep.subr.mxu0 %v111
    %939 = vmatpush1.msra.mxu0 %v110
    %940 = vmatprep.subr.mxu0 0.0
    %941 = vmatpush1.msra.mxu0 0.0
    %942 = vmatprep.subr.mxu0 0.0
    %943 = vmatpush1.msra.mxu0 0.0
    %944 = vmatprep.subr.mxu0 0.0
    %945 = vmatpush1.msra.mxu0 0.0
    %946 = vmatprep.subr.mxu0 0.0
    %947 = vmatpush1.msra.mxu0 0.0
    %948 = vmatprep.subr.mxu0 0.0
    %949 = vmatpush1.msra.mxu0 0.0
    %950 = vmatprep.subr.mxu0 0.0
    %951 = vmatpush1.msra.mxu0 0.0
    %952 = vmatprep.subr.mxu0 0.0
    %953 = vmatpush1.msra.mxu0 0.0
    %954 = vmatprep.subr.mxu0 0.0
    %955 = vmatpush1.msra.mxu0 0.0
    %956 = vmatprep.subr.mxu0 0.0
    %957 = vmatpush1.msra.mxu0 0.0
    %958 = vmatprep.subr.mxu0 0.0
    %959 = vmatpush1.msra.mxu0 0.0
    %960 = vmatprep.subr.mxu0 0.0
    %961 = vmatpush1.msra.mxu0 0.0
    %962 = vmatprep.subr.mxu0 0.0
    %963 = vmatpush1.msra.mxu0 0.0
    %964 = vmatprep.subr.mxu0 0.0
    %965 = vmatpush1.msra.mxu0 0.0
    %966 = vmatprep.subr.mxu0 0.0
    %967 = vmatpush1.msra.mxu0 0.0
    %968 = vmatprep.subr.mxu0 0.0
    %969 = vmatpush1.msra.mxu0 0.0
    %970 = vmatprep.subr.mxu0 0.0
    %971 = vmatpush1.msra.mxu0 0.0
    %972 = vmatprep.mubr.f32.mxu0 0.0
    %973 = vmatmul.mubr.f32.gmra.mrb[0].mxu0 %v904
    %v974 = vpop.f32.mrb[0].mxu0
    %v975 = vadd.f32 0.0, %v974
    %v976 = vpop.f32.mrb[0].mxu0
    %v977 = vadd.f32 0.0, %v976
    %978 = vdwg.mxu0
    %979 = vmatprep.subr.mxu0 %v53
    %980 = vmatpush1.msra.mxu0 %v52
    %981 = vmatprep.subr.mxu0 %v57
    %982 = vmatpush1.msra.mxu0 %v56
    %983 = vmatprep.subr.mxu0 %v61
    %984 = vmatpush1.msra.mxu0 %v60
    %985 = vmatprep.subr.mxu0 %v65
    %986 = vmatpush1.msra.mxu0 %v64
    %987 = vmatprep.subr.mxu0 %v69
    %988 = vmatpush1.msra.mxu0 %v68
    %989 = vmatprep.subr.mxu0 %v73
    %990 = vmatpush1.msra.mxu0 %v72
    %991 = vmatprep.subr.mxu0 %v77
    %992 = vmatpush1.msra.mxu0 %v76
    %993 = vmatprep.subr.mxu0 %v81
    %994 = vmatpush1.msra.mxu0 %v80
    %995 = vmatprep.subr.mxu0 %v85
    %996 = vmatpush1.msra.mxu0 %v84
    %997 = vmatprep.subr.mxu0 %v89
    %998 = vmatpush1.msra.mxu0 %v88
    %999 = vmatprep.subr.mxu0 %v93
    %1000 = vmatpush1.msra.mxu0 %v92
    %1001 = vmatprep.subr.mxu0 %v97
    %1002 = vmatpush1.msra.mxu0 %v96
    %1003 = vmatprep.subr.mxu0 %v101
    %1004 = vmatpush1.msra.mxu0 %v100
    %1005 = vmatprep.subr.mxu0 %v105
    %1006 = vmatpush1.msra.mxu0 %v104
    %1007 = vmatprep.subr.mxu0 %v109
    %1008 = vmatpush1.msra.mxu0 %v108
    %1009 = vmatprep.subr.mxu0 %v113
    %1010 = vmatpush1.msra.mxu0 %v112
    %1011 = vmatprep.subr.mxu0 0.0
    %1012 = vmatpush1.msra.mxu0 0.0
    %1013 = vmatprep.subr.mxu0 0.0
    %1014 = vmatpush1.msra.mxu0 0.0
    %1015 = vmatprep.subr.mxu0 0.0
    %1016 = vmatpush1.msra.mxu0 0.0
    %1017 = vmatprep.subr.mxu0 0.0
    %1018 = vmatpush1.msra.mxu0 0.0
    %1019 = vmatprep.subr.mxu0 0.0
    %1020 = vmatpush1.msra.mxu0 0.0
    %1021 = vmatprep.subr.mxu0 0.0
    %1022 = vmatpush1.msra.mxu0 0.0
    %1023 = vmatprep.subr.mxu0 0.0
    %1024 = vmatpush1.msra.mxu0 0.0
    %1025 = vmatprep.subr.mxu0 0.0
    %1026 = vmatpush1.msra.mxu0 0.0
    %1027 = vmatprep.subr.mxu0 0.0
    %1028 = vmatpush1.msra.mxu0 0.0
    %1029 = vmatprep.subr.mxu0 0.0
    %1030 = vmatpush1.msra.mxu0 0.0
    %1031 = vmatprep.subr.mxu0 0.0
    %1032 = vmatpush1.msra.mxu0 0.0
    %1033 = vmatprep.subr.mxu0 0.0
    %1034 = vmatpush1.msra.mxu0 0.0
    %1035 = vmatprep.subr.mxu0 0.0
    %1036 = vmatpush1.msra.mxu0 0.0
    %1037 = vmatprep.subr.mxu0 0.0
    %1038 = vmatpush1.msra.mxu0 0.0
    %1039 = vmatprep.subr.mxu0 0.0
    %1040 = vmatpush1.msra.mxu0 0.0
    %1041 = vmatprep.subr.mxu0 0.0
    %1042 = vmatpush1.msra.mxu0 0.0
    %1043 = vmatprep.mubr.f32.mxu0 0.0
    %1044 = vmatmul.mubr.f32.gmra.mrb[0].mxu0 %v904
    %v1045 = vpop.f32.mrb[0].mxu0
    %v1046 = vadd.f32 0.0, %v1045
    %v1047 = vpop.f32.mrb[0].mxu0
    %v1048 = vadd.f32 0.0, %v1047
    %1049 = vdwg.mxu0
    %v1054 = vcombine.low %v975, %v977
    %v1055 = vcombine.low %v1046, %v1048
    %v1057 = vunpack.c.l.s4 1983009808
    %v1058 = vunpack.c.0.s8 %v1057
    %v1059 = vlaneseq
    %v1060 = vshrl.u32 %v1059, 7
    %v1061 = vsub.s32 %v1058, %v1060
    %v1062 = vrot.slane %v1054, %v1061
    %v1064 = vunpack.c.l.s4 1983009808
    %v1065 = vunpack.c.0.s8 %v1064
    %v1066 = vlaneseq
    %v1067 = vshrl.u32 %v1066, 7
    %v1068 = vsub.s32 %v1065, %v1067
    %v1069 = vrot.slane %v1055, %v1068
    %v1070 = vcombine.low %v1062, %v1069
    %v1072 = vadd.f32 %v907, %v1070
    %v1073 = vmul.f32 %v1072, 0.5
    %v1074 = vtanh.pop %v1073
    %v1075 = vmul.f32 %v1074, 0.5
    %v1076 = vadd.f32 %v1075, 0.5
    %v1078 = vrot.slane %v1072, 2
    %v1080 = vmul.f32 %v1078, 0.5
    %v1081 = vtanh.pop %v1080
    %v1082 = vmul.f32 %v1081, 0.5
    %v1083 = vadd.f32 %v1082, 0.5
    %v1084 = vrot.slane %v1072, 4
    %v1086 = vtanh.pop %v1084
    %v1087 = vrot.slane %v1072, 6
    %v1089 = vmul.f32 %v1087, 0.5
    %v1090 = vtanh.pop %v1089
    %v1091 = vmul.f32 %v1090, 0.5
    %v1092 = vadd.f32 %v1091, 0.5
    %v1093 = vmul.f32 %v1083, %v905
    %v1094 = vmul.f32 %v1076, %v1086
    %v1095 = vadd.f32 %v1093, %v1094
    %v1096 = vtanh.pop %v1095
    %v1097 = vmul.f32 %v1092, %v1096
    %1098 = vst [vmem:[#allocation10] sm:$0x3] %v1095
    %1099 = vst [vmem:[#allocation8] sm:$0x3] %v1097
    %s1100 = scalar_lea.vmem [#allocation7], 8
    %1101 = vst [vmem:[%s1100] sm:$0x3] %v1097
    %v1102 = vld [vmem:[#allocation8] sm:$0x3]
    %v1103 = vld [vmem:[#allocation10] sm:$0x3]
    %s1104 = scalar_lea.vmem [#allocation2], 40
    %v1105 = vld [vmem:[%s1104] sm:$0xff]
    %1106 = vmatprep.subr.mxu0 %v51
    %1107 = vmatpush1.msra.mxu0 %v50
    %1108 = vmatprep.subr.mxu0 %v55
    %1109 = vmatpush1.msra.mxu0 %v54
    %1110 = vmatprep.subr.mxu0 %v59
    %1111 = vmatpush1.msra.mxu0 %v58
    %1112 = vmatprep.subr.mxu0 %v63
    %1113 = vmatpush1.msra.mxu0 %v62
    %1114 = vmatprep.subr.mxu0 %v67
    %1115 = vmatpush1.msra.mxu0 %v66
    %1116 = vmatprep.subr.mxu0 %v71
    %1117 = vmatpush1.msra.mxu0 %v70
    %1118 = vmatprep.subr.mxu0 %v75
    %1119 = vmatpush1.msra.mxu0 %v74
    %1120 = vmatprep.subr.mxu0 %v79
    %1121 = vmatpush1.msra.mxu0 %v78
    %1122 = vmatprep.subr.mxu0 %v83
    %1123 = vmatpush1.msra.mxu0 %v82
    %1124 = vmatprep.subr.mxu0 %v87
    %1125 = vmatpush1.msra.mxu0 %v86
    %1126 = vmatprep.subr.mxu0 %v91
    %1127 = vmatpush1.msra.mxu0 %v90
    %1128 = vmatprep.subr.mxu0 %v95
    %1129 = vmatpush1.msra.mxu0 %v94
    %1130 = vmatprep.subr.mxu0 %v99
    %1131 = vmatpush1.msra.mxu0 %v98
    %1132 = vmatprep.subr.mxu0 %v103
    %1133 = vmatpush1.msra.mxu0 %v102
    %1134 = vmatprep.subr.mxu0 %v107
    %1135 = vmatpush1.msra.mxu0 %v106
    %1136 = vmatprep.subr.mxu0 %v111
    %1137 = vmatpush1.msra.mxu0 %v110
    %1138 = vmatprep.subr.mxu0 0.0
    %1139 = vmatpush1.msra.mxu0 0.0
    %1140 = vmatprep.subr.mxu0 0.0
    %1141 = vmatpush1.msra.mxu0 0.0
    %1142 = vmatprep.subr.mxu0 0.0
    %1143 = vmatpush1.msra.mxu0 0.0
    %1144 = vmatprep.subr.mxu0 0.0
    %1145 = vmatpush1.msra.mxu0 0.0
    %1146 = vmatprep.subr.mxu0 0.0
    %1147 = vmatpush1.msra.mxu0 0.0
    %1148 = vmatprep.subr.mxu0 0.0
    %1149 = vmatpush1.msra.mxu0 0.0
    %1150 = vmatprep.subr.mxu0 0.0
    %1151 = vmatpush1.msra.mxu0 0.0
    %1152 = vmatprep.subr.mxu0 0.0
    %1153 = vmatpush1.msra.mxu0 0.0
    %1154 = vmatprep.subr.mxu0 0.0
    %1155 = vmatpush1.msra.mxu0 0.0
    %1156 = vmatprep.subr.mxu0 0.0
    %1157 = vmatpush1.msra.mxu0 0.0
    %1158 = vmatprep.subr.mxu0 0.0
    %1159 = vmatpush1.msra.mxu0 0.0
    %1160 = vmatprep.subr.mxu0 0.0
    %1161 = vmatpush1.msra.mxu0 0.0
    %1162 = vmatprep.subr.mxu0 0.0
    %1163 = vmatpush1.msra.mxu0 0.0
    %1164 = vmatprep.subr.mxu0 0.0
    %1165 = vmatpush1.msra.mxu0 0.0
    %1166 = vmatprep.subr.mxu0 0.0
    %1167 = vmatpush1.msra.mxu0 0.0
    %1168 = vmatprep.subr.mxu0 0.0
    %1169 = vmatpush1.msra.mxu0 0.0
    %1170 = vmatprep.mubr.f32.mxu0 0.0
    %1171 = vmatmul.mubr.f32.gmra.mrb[0].mxu0 %v1102
    %v1172 = vpop.f32.mrb[0].mxu0
    %v1173 = vadd.f32 0.0, %v1172
    %v1174 = vpop.f32.mrb[0].mxu0
    %v1175 = vadd.f32 0.0, %v1174
    %1176 = vdwg.mxu0
    %1177 = vmatprep.subr.mxu0 %v53
    %1178 = vmatpush1.msra.mxu0 %v52
    %1179 = vmatprep.subr.mxu0 %v57
    %1180 = vmatpush1.msra.mxu0 %v56
    %1181 = vmatprep.subr.mxu0 %v61
    %1182 = vmatpush1.msra.mxu0 %v60
    %1183 = vmatprep.subr.mxu0 %v65
    %1184 = vmatpush1.msra.mxu0 %v64
    %1185 = vmatprep.subr.mxu0 %v69
    %1186 = vmatpush1.msra.mxu0 %v68
    %1187 = vmatprep.subr.mxu0 %v73
    %1188 = vmatpush1.msra.mxu0 %v72
    %1189 = vmatprep.subr.mxu0 %v77
    %1190 = vmatpush1.msra.mxu0 %v76
    %1191 = vmatprep.subr.mxu0 %v81
    %1192 = vmatpush1.msra.mxu0 %v80
    %1193 = vmatprep.subr.mxu0 %v85
    %1194 = vmatpush1.msra.mxu0 %v84
    %1195 = vmatprep.subr.mxu0 %v89
    %1196 = vmatpush1.msra.mxu0 %v88
    %1197 = vmatprep.subr.mxu0 %v93
    %1198 = vmatpush1.msra.mxu0 %v92
    %1199 = vmatprep.subr.mxu0 %v97
    %1200 = vmatpush1.msra.mxu0 %v96
    %1201 = vmatprep.subr.mxu0 %v101
    %1202 = vmatpush1.msra.mxu0 %v100
    %1203 = vmatprep.subr.mxu0 %v105
    %1204 = vmatpush1.msra.mxu0 %v104
    %1205 = vmatprep.subr.mxu0 %v109
    %1206 = vmatpush1.msra.mxu0 %v108
    %1207 = vmatprep.subr.mxu0 %v113
    %1208 = vmatpush1.msra.mxu0 %v112
    %1209 = vmatprep.subr.mxu0 0.0
    %1210 = vmatpush1.msra.mxu0 0.0
    %1211 = vmatprep.subr.mxu0 0.0
    %1212 = vmatpush1.msra.mxu0 0.0
    %1213 = vmatprep.subr.mxu0 0.0
    %1214 = vmatpush1.msra.mxu0 0.0
    %1215 = vmatprep.subr.mxu0 0.0
    %1216 = vmatpush1.msra.mxu0 0.0
    %1217 = vmatprep.subr.mxu0 0.0
    %1218 = vmatpush1.msra.mxu0 0.0
    %1219 = vmatprep.subr.mxu0 0.0
    %1220 = vmatpush1.msra.mxu0 0.0
    %1221 = vmatprep.subr.mxu0 0.0
    %1222 = vmatpush1.msra.mxu0 0.0
    %1223 = vmatprep.subr.mxu0 0.0
    %1224 = vmatpush1.msra.mxu0 0.0
    %1225 = vmatprep.subr.mxu0 0.0
    %1226 = vmatpush1.msra.mxu0 0.0
    %1227 = vmatprep.subr.mxu0 0.0
    %1228 = vmatpush1.msra.mxu0 0.0
    %1229 = vmatprep.subr.mxu0 0.0
    %1230 = vmatpush1.msra.mxu0 0.0
    %1231 = vmatprep.subr.mxu0 0.0
    %1232 = vmatpush1.msra.mxu0 0.0
    %1233 = vmatprep.subr.mxu0 0.0
    %1234 = vmatpush1.msra.mxu0 0.0
    %1235 = vmatprep.subr.mxu0 0.0
    %1236 = vmatpush1.msra.mxu0 0.0
    %1237 = vmatprep.subr.mxu0 0.0
    %1238 = vmatpush1.msra.mxu0 0.0
    %1239 = vmatprep.subr.mxu0 0.0
    %1240 = vmatpush1.msra.mxu0 0.0
    %1241 = vmatprep.mubr.f32.mxu0 0.0
    %1242 = vmatmul.mubr.f32.gmra.mrb[0].mxu0 %v1102
    %v1243 = vpop.f32.mrb[0].mxu0
    %v1244 = vadd.f32 0.0, %v1243
    %v1245 = vpop.f32.mrb[0].mxu0
    %v1246 = vadd.f32 0.0, %v1245
    %1247 = vdwg.mxu0
    %v1252 = vcombine.low %v1173, %v1175
    %v1253 = vcombine.low %v1244, %v1246
    %v1255 = vunpack.c.l.s4 1983009808
    %v1256 = vunpack.c.0.s8 %v1255
    %v1257 = vlaneseq
    %v1258 = vshrl.u32 %v1257, 7
    %v1259 = vsub.s32 %v1256, %v1258
    %v1260 = vrot.slane %v1252, %v1259
    %v1262 = vunpack.c.l.s4 1983009808
    %v1263 = vunpack.c.0.s8 %v1262
    %v1264 = vlaneseq
    %v1265 = vshrl.u32 %v1264, 7
    %v1266 = vsub.s32 %v1263, %v1265
    %v1267 = vrot.slane %v1253, %v1266
    %v1268 = vcombine.low %v1260, %v1267
    %v1270 = vadd.f32 %v1105, %v1268
    %v1271 = vmul.f32 %v1270, 0.5
    %v1272 = vtanh.pop %v1271
    %v1273 = vmul.f32 %v1272, 0.5
    %v1274 = vadd.f32 %v1273, 0.5
    %v1276 = vrot.slane %v1270, 2
    %v1278 = vmul.f32 %v1276, 0.5
    %v1279 = vtanh.pop %v1278
    %v1280 = vmul.f32 %v1279, 0.5
    %v1281 = vadd.f32 %v1280, 0.5
    %v1282 = vrot.slane %v1270, 4
    %v1284 = vtanh.pop %v1282
    %v1285 = vrot.slane %v1270, 6
    %v1287 = vmul.f32 %v1285, 0.5
    %v1288 = vtanh.pop %v1287
    %v1289 = vmul.f32 %v1288, 0.5
    %v1290 = vadd.f32 %v1289, 0.5
    %v1291 = vmul.f32 %v1281, %v1103
    %v1292 = vmul.f32 %v1274, %v1284
    %v1293 = vadd.f32 %v1291, %v1292
    %v1294 = vtanh.pop %v1293
    %v1295 = vmul.f32 %v1290, %v1294
    %1296 = vst [vmem:[#allocation10] sm:$0x3] %v1293
    %1297 = vst [vmem:[#allocation8] sm:$0x3] %v1295
    %s1298 = scalar_lea.vmem [#allocation7], 10
    %1299 = vst [vmem:[%s1298] sm:$0x3] %v1295
    %v1300 = vld [vmem:[#allocation8] sm:$0x3]
    %v1301 = vld [vmem:[#allocation10] sm:$0x3]
    %s1302 = scalar_lea.vmem [#allocation2], 48
    %v1303 = vld [vmem:[%s1302] sm:$0xff]
    %1304 = vmatprep.subr.mxu0 %v51
    %1305 = vmatpush1.msra.mxu0 %v50
    %1306 = vmatprep.subr.mxu0 %v55
    %1307 = vmatpush1.msra.mxu0 %v54
    %1308 = vmatprep.subr.mxu0 %v59
    %1309 = vmatpush1.msra.mxu0 %v58
    %1310 = vmatprep.subr.mxu0 %v63
    %1311 = vmatpush1.msra.mxu0 %v62
    %1312 = vmatprep.subr.mxu0 %v67
    %1313 = vmatpush1.msra.mxu0 %v66
    %1314 = vmatprep.subr.mxu0 %v71
    %1315 = vmatpush1.msra.mxu0 %v70
    %1316 = vmatprep.subr.mxu0 %v75
    %1317 = vmatpush1.msra.mxu0 %v74
    %1318 = vmatprep.subr.mxu0 %v79
    %1319 = vmatpush1.msra.mxu0 %v78
    %1320 = vmatprep.subr.mxu0 %v83
    %1321 = vmatpush1.msra.mxu0 %v82
    %1322 = vmatprep.subr.mxu0 %v87
    %1323 = vmatpush1.msra.mxu0 %v86
    %1324 = vmatprep.subr.mxu0 %v91
    %1325 = vmatpush1.msra.mxu0 %v90
    %1326 = vmatprep.subr.mxu0 %v95
    %1327 = vmatpush1.msra.mxu0 %v94
    %1328 = vmatprep.subr.mxu0 %v99
    %1329 = vmatpush1.msra.mxu0 %v98
    %1330 = vmatprep.subr.mxu0 %v103
    %1331 = vmatpush1.msra.mxu0 %v102
    %1332 = vmatprep.subr.mxu0 %v107
    %1333 = vmatpush1.msra.mxu0 %v106
    %1334 = vmatprep.subr.mxu0 %v111
    %1335 = vmatpush1.msra.mxu0 %v110
    %1336 = vmatprep.subr.mxu0 0.0
    %1337 = vmatpush1.msra.mxu0 0.0
    %1338 = vmatprep.subr.mxu0 0.0
    %1339 = vmatpush1.msra.mxu0 0.0
    %1340 = vmatprep.subr.mxu0 0.0
    %1341 = vmatpush1.msra.mxu0 0.0
    %1342 = vmatprep.subr.mxu0 0.0
    %1343 = vmatpush1.msra.mxu0 0.0
    %1344 = vmatprep.subr.mxu0 0.0
    %1345 = vmatpush1.msra.mxu0 0.0
    %1346 = vmatprep.subr.mxu0 0.0
    %1347 = vmatpush1.msra.mxu0 0.0
    %1348 = vmatprep.subr.mxu0 0.0
    %1349 = vmatpush1.msra.mxu0 0.0
    %1350 = vmatprep.subr.mxu0 0.0
    %1351 = vmatpush1.msra.mxu0 0.0
    %1352 = vmatprep.subr.mxu0 0.0
    %1353 = vmatpush1.msra.mxu0 0.0
    %1354 = vmatprep.subr.mxu0 0.0
    %1355 = vmatpush1.msra.mxu0 0.0
    %1356 = vmatprep.subr.mxu0 0.0
    %1357 = vmatpush1.msra.mxu0 0.0
    %1358 = vmatprep.subr.mxu0 0.0
    %1359 = vmatpush1.msra.mxu0 0.0
    %1360 = vmatprep.subr.mxu0 0.0
    %1361 = vmatpush1.msra.mxu0 0.0
    %1362 = vmatprep.subr.mxu0 0.0
    %1363 = vmatpush1.msra.mxu0 0.0
    %1364 = vmatprep.subr.mxu0 0.0
    %1365 = vmatpush1.msra.mxu0 0.0
    %1366 = vmatprep.subr.mxu0 0.0
    %1367 = vmatpush1.msra.mxu0 0.0
    %1368 = vmatprep.mubr.f32.mxu0 0.0
    %1369 = vmatmul.mubr.f32.gmra.mrb[0].mxu0 %v1300
    %v1370 = vpop.f32.mrb[0].mxu0
    %v1371 = vadd.f32 0.0, %v1370
    %v1372 = vpop.f32.mrb[0].mxu0
    %v1373 = vadd.f32 0.0, %v1372
    %1374 = vdwg.mxu0
    %1375 = vmatprep.subr.mxu0 %v53
    %1376 = vmatpush1.msra.mxu0 %v52
    %1377 = vmatprep.subr.mxu0 %v57
    %1378 = vmatpush1.msra.mxu0 %v56
    %1379 = vmatprep.subr.mxu0 %v61
    %1380 = vmatpush1.msra.mxu0 %v60
    %1381 = vmatprep.subr.mxu0 %v65
    %1382 = vmatpush1.msra.mxu0 %v64
    %1383 = vmatprep.subr.mxu0 %v69
    %1384 = vmatpush1.msra.mxu0 %v68
    %1385 = vmatprep.subr.mxu0 %v73
    %1386 = vmatpush1.msra.mxu0 %v72
    %1387 = vmatprep.subr.mxu0 %v77
    %1388 = vmatpush1.msra.mxu0 %v76
    %1389 = vmatprep.subr.mxu0 %v81
    %1390 = vmatpush1.msra.mxu0 %v80
    %1391 = vmatprep.subr.mxu0 %v85
    %1392 = vmatpush1.msra.mxu0 %v84
    %1393 = vmatprep.subr.mxu0 %v89
    %1394 = vmatpush1.msra.mxu0 %v88
    %1395 = vmatprep.subr.mxu0 %v93
    %1396 = vmatpush1.msra.mxu0 %v92
    %1397 = vmatprep.subr.mxu0 %v97
    %1398 = vmatpush1.msra.mxu0 %v96
    %1399 = vmatprep.subr.mxu0 %v101
    %1400 = vmatpush1.msra.mxu0 %v100
    %1401 = vmatprep.subr.mxu0 %v105
    %1402 = vmatpush1.msra.mxu0 %v104
    %1403 = vmatprep.subr.mxu0 %v109
    %1404 = vmatpush1.msra.mxu0 %v108
    %1405 = vmatprep.subr.mxu0 %v113
    %1406 = vmatpush1.msra.mxu0 %v112
    %1407 = vmatprep.subr.mxu0 0.0
    %1408 = vmatpush1.msra.mxu0 0.0
    %1409 = vmatprep.subr.mxu0 0.0
    %1410 = vmatpush1.msra.mxu0 0.0
    %1411 = vmatprep.subr.mxu0 0.0
    %1412 = vmatpush1.msra.mxu0 0.0
    %1413 = vmatprep.subr.mxu0 0.0
    %1414 = vmatpush1.msra.mxu0 0.0
    %1415 = vmatprep.subr.mxu0 0.0
    %1416 = vmatpush1.msra.mxu0 0.0
    %1417 = vmatprep.subr.mxu0 0.0
    %1418 = vmatpush1.msra.mxu0 0.0
    %1419 = vmatprep.subr.mxu0 0.0
    %1420 = vmatpush1.msra.mxu0 0.0
    %1421 = vmatprep.subr.mxu0 0.0
    %1422 = vmatpush1.msra.mxu0 0.0
    %1423 = vmatprep.subr.mxu0 0.0
    %1424 = vmatpush1.msra.mxu0 0.0
    %1425 = vmatprep.subr.mxu0 0.0
    %1426 = vmatpush1.msra.mxu0 0.0
    %1427 = vmatprep.subr.mxu0 0.0
    %1428 = vmatpush1.msra.mxu0 0.0
    %1429 = vmatprep.subr.mxu0 0.0
    %1430 = vmatpush1.msra.mxu0 0.0
    %1431 = vmatprep.subr.mxu0 0.0
    %1432 = vmatpush1.msra.mxu0 0.0
    %1433 = vmatprep.subr.mxu0 0.0
    %1434 = vmatpush1.msra.mxu0 0.0
    %1435 = vmatprep.subr.mxu0 0.0
    %1436 = vmatpush1.msra.mxu0 0.0
    %1437 = vmatprep.subr.mxu0 0.0
    %1438 = vmatpush1.msra.mxu0 0.0
    %1439 = vmatprep.mubr.f32.mxu0 0.0
    %1440 = vmatmul.mubr.f32.gmra.mrb[0].mxu0 %v1300
    %v1441 = vpop.f32.mrb[0].mxu0
    %v1442 = vadd.f32 0.0, %v1441
    %v1443 = vpop.f32.mrb[0].mxu0
    %v1444 = vadd.f32 0.0, %v1443
    %1445 = vdwg.mxu0
    %v1450 = vcombine.low %v1371, %v1373
    %v1451 = vcombine.low %v1442, %v1444
    %v1453 = vunpack.c.l.s4 1983009808
    %v1454 = vunpack.c.0.s8 %v1453
    %v1455 = vlaneseq
    %v1456 = vshrl.u32 %v1455, 7
    %v1457 = vsub.s32 %v1454, %v1456
    %v1458 = vrot.slane %v1450, %v1457
    %v1460 = vunpack.c.l.s4 1983009808
    %v1461 = vunpack.c.0.s8 %v1460
    %v1462 = vlaneseq
    %v1463 = vshrl.u32 %v1462, 7
    %v1464 = vsub.s32 %v1461, %v1463
    %v1465 = vrot.slane %v1451, %v1464
    %v1466 = vcombine.low %v1458, %v1465
    %v1468 = vadd.f32 %v1303, %v1466
    %v1469 = vmul.f32 %v1468, 0.5
    %v1470 = vtanh.pop %v1469
    %v1471 = vmul.f32 %v1470, 0.5
    %v1472 = vadd.f32 %v1471, 0.5
    %v1474 = vrot.slane %v1468, 2
    %v1476 = vmul.f32 %v1474, 0.5
    %v1477 = vtanh.pop %v1476
    %v1478 = vmul.f32 %v1477, 0.5
    %v1479 = vadd.f32 %v1478, 0.5
    %v1480 = vrot.slane %v1468, 4
    %v1482 = vtanh.pop %v1480
    %v1483 = vrot.slane %v1468, 6
    %v1485 = vmul.f32 %v1483, 0.5
    %v1486 = vtanh.pop %v1485
    %v1487 = vmul.f32 %v1486, 0.5
    %v1488 = vadd.f32 %v1487, 0.5
    %v1489 = vmul.f32 %v1479, %v1301
    %v1490 = vmul.f32 %v1472, %v1482
    %v1491 = vadd.f32 %v1489, %v1490
    %v1492 = vtanh.pop %v1491
    %v1493 = vmul.f32 %v1488, %v1492
    %1494 = vst [vmem:[#allocation10] sm:$0x3] %v1491
    %1495 = vst [vmem:[#allocation8] sm:$0x3] %v1493
    %s1496 = scalar_lea.vmem [#allocation7], 12
    %1497 = vst [vmem:[%s1496] sm:$0x3] %v1493
    %v1498 = vld [vmem:[#allocation8] sm:$0x3]
    %v1499 = vld [vmem:[#allocation10] sm:$0x3]
    %s1500 = scalar_lea.vmem [#allocation2], 56
    %v1501 = vld [vmem:[%s1500] sm:$0xff]
    %1502 = vmatprep.subr.mxu0 %v51
    %1503 = vmatpush1.msra.mxu0 %v50
    %1504 = vmatprep.subr.mxu0 %v55
    %1505 = vmatpush1.msra.mxu0 %v54
    %1506 = vmatprep.subr.mxu0 %v59
    %1507 = vmatpush1.msra.mxu0 %v58
    %1508 = vmatprep.subr.mxu0 %v63
    %1509 = vmatpush1.msra.mxu0 %v62
    %1510 = vmatprep.subr.mxu0 %v67
    %1511 = vmatpush1.msra.mxu0 %v66
    %1512 = vmatprep.subr.mxu0 %v71
    %1513 = vmatpush1.msra.mxu0 %v70
    %1514 = vmatprep.subr.mxu0 %v75
    %1515 = vmatpush1.msra.mxu0 %v74
    %1516 = vmatprep.subr.mxu0 %v79
    %1517 = vmatpush1.msra.mxu0 %v78
    %1518 = vmatprep.subr.mxu0 %v83
    %1519 = vmatpush1.msra.mxu0 %v82
    %1520 = vmatprep.subr.mxu0 %v87
    %1521 = vmatpush1.msra.mxu0 %v86
    %1522 = vmatprep.subr.mxu0 %v91
    %1523 = vmatpush1.msra.mxu0 %v90
    %1524 = vmatprep.subr.mxu0 %v95
    %1525 = vmatpush1.msra.mxu0 %v94
    %1526 = vmatprep.subr.mxu0 %v99
    %1527 = vmatpush1.msra.mxu0 %v98
    %1528 = vmatprep.subr.mxu0 %v103
    %1529 = vmatpush1.msra.mxu0 %v102
    %1530 = vmatprep.subr.mxu0 %v107
    %1531 = vmatpush1.msra.mxu0 %v106
    %1532 = vmatprep.subr.mxu0 %v111
    %1533 = vmatpush1.msra.mxu0 %v110
    %1534 = vmatprep.subr.mxu0 0.0
    %1535 = vmatpush1.msra.mxu0 0.0
    %1536 = vmatprep.subr.mxu0 0.0
    %1537 = vmatpush1.msra.mxu0 0.0
    %1538 = vmatprep.subr.mxu0 0.0
    %1539 = vmatpush1.msra.mxu0 0.0
    %1540 = vmatprep.subr.mxu0 0.0
    %1541 = vmatpush1.msra.mxu0 0.0
    %1542 = vmatprep.subr.mxu0 0.0
    %1543 = vmatpush1.msra.mxu0 0.0
    %1544 = vmatprep.subr.mxu0 0.0
    %1545 = vmatpush1.msra.mxu0 0.0
    %1546 = vmatprep.subr.mxu0 0.0
    %1547 = vmatpush1.msra.mxu0 0.0
    %1548 = vmatprep.subr.mxu0 0.0
    %1549 = vmatpush1.msra.mxu0 0.0
    %1550 = vmatprep.subr.mxu0 0.0
    %1551 = vmatpush1.msra.mxu0 0.0
    %1552 = vmatprep.subr.mxu0 0.0
    %1553 = vmatpush1.msra.mxu0 0.0
    %1554 = vmatprep.subr.mxu0 0.0
    %1555 = vmatpush1.msra.mxu0 0.0
    %1556 = vmatprep.subr.mxu0 0.0
    %1557 = vmatpush1.msra.mxu0 0.0
    %1558 = vmatprep.subr.mxu0 0.0
    %1559 = vmatpush1.msra.mxu0 0.0
    %1560 = vmatprep.subr.mxu0 0.0
    %1561 = vmatpush1.msra.mxu0 0.0
    %1562 = vmatprep.subr.mxu0 0.0
    %1563 = vmatpush1.msra.mxu0 0.0
    %1564 = vmatprep.subr.mxu0 0.0
    %1565 = vmatpush1.msra.mxu0 0.0
    %1566 = vmatprep.mubr.f32.mxu0 0.0
    %1567 = vmatmul.mubr.f32.gmra.mrb[0].mxu0 %v1498
    %v1568 = vpop.f32.mrb[0].mxu0
    %v1569 = vadd.f32 0.0, %v1568
    %v1570 = vpop.f32.mrb[0].mxu0
    %v1571 = vadd.f32 0.0, %v1570
    %1572 = vdwg.mxu0
    %1573 = vmatprep.subr.mxu0 %v53
    %1574 = vmatpush1.msra.mxu0 %v52
    %1575 = vmatprep.subr.mxu0 %v57
    %1576 = vmatpush1.msra.mxu0 %v56
    %1577 = vmatprep.subr.mxu0 %v61
    %1578 = vmatpush1.msra.mxu0 %v60
    %1579 = vmatprep.subr.mxu0 %v65
    %1580 = vmatpush1.msra.mxu0 %v64
    %1581 = vmatprep.subr.mxu0 %v69
    %1582 = vmatpush1.msra.mxu0 %v68
    %1583 = vmatprep.subr.mxu0 %v73
    %1584 = vmatpush1.msra.mxu0 %v72
    %1585 = vmatprep.subr.mxu0 %v77
    %1586 = vmatpush1.msra.mxu0 %v76
    %1587 = vmatprep.subr.mxu0 %v81
    %1588 = vmatpush1.msra.mxu0 %v80
    %1589 = vmatprep.subr.mxu0 %v85
    %1590 = vmatpush1.msra.mxu0 %v84
    %1591 = vmatprep.subr.mxu0 %v89
    %1592 = vmatpush1.msra.mxu0 %v88
    %1593 = vmatprep.subr.mxu0 %v93
    %1594 = vmatpush1.msra.mxu0 %v92
    %1595 = vmatprep.subr.mxu0 %v97
    %1596 = vmatpush1.msra.mxu0 %v96
    %1597 = vmatprep.subr.mxu0 %v101
    %1598 = vmatpush1.msra.mxu0 %v100
    %1599 = vmatprep.subr.mxu0 %v105
    %1600 = vmatpush1.msra.mxu0 %v104
    %1601 = vmatprep.subr.mxu0 %v109
    %1602 = vmatpush1.msra.mxu0 %v108
    %1603 = vmatprep.subr.mxu0 %v113
    %1604 = vmatpush1.msra.mxu0 %v112
    %1605 = vmatprep.subr.mxu0 0.0
    %1606 = vmatpush1.msra.mxu0 0.0
    %1607 = vmatprep.subr.mxu0 0.0
    %1608 = vmatpush1.msra.mxu0 0.0
    %1609 = vmatprep.subr.mxu0 0.0
    %1610 = vmatpush1.msra.mxu0 0.0
    %1611 = vmatprep.subr.mxu0 0.0
    %1612 = vmatpush1.msra.mxu0 0.0
    %1613 = vmatprep.subr.mxu0 0.0
    %1614 = vmatpush1.msra.mxu0 0.0
    %1615 = vmatprep.subr.mxu0 0.0
    %1616 = vmatpush1.msra.mxu0 0.0
    %1617 = vmatprep.subr.mxu0 0.0
    %1618 = vmatpush1.msra.mxu0 0.0
    %1619 = vmatprep.subr.mxu0 0.0
    %1620 = vmatpush1.msra.mxu0 0.0
    %1621 = vmatprep.subr.mxu0 0.0
    %1622 = vmatpush1.msra.mxu0 0.0
    %1623 = vmatprep.subr.mxu0 0.0
    %1624 = vmatpush1.msra.mxu0 0.0
    %1625 = vmatprep.subr.mxu0 0.0
    %1626 = vmatpush1.msra.mxu0 0.0
    %1627 = vmatprep.subr.mxu0 0.0
    %1628 = vmatpush1.msra.mxu0 0.0
    %1629 = vmatprep.subr.mxu0 0.0
    %1630 = vmatpush1.msra.mxu0 0.0
    %1631 = vmatprep.subr.mxu0 0.0
    %1632 = vmatpush1.msra.mxu0 0.0
    %1633 = vmatprep.subr.mxu0 0.0
    %1634 = vmatpush1.msra.mxu0 0.0
    %1635 = vmatprep.subr.mxu0 0.0
    %1636 = vmatpush1.msra.mxu0 0.0
    %1637 = vmatprep.mubr.f32.mxu0 0.0
    %1638 = vmatmul.mubr.f32.gmra.mrb[0].mxu0 %v1498
    %v1639 = vpop.f32.mrb[0].mxu0
    %v1640 = vadd.f32 0.0, %v1639
    %v1641 = vpop.f32.mrb[0].mxu0
    %v1642 = vadd.f32 0.0, %v1641
    %1643 = vdwg.mxu0
    %v1648 = vcombine.low %v1569, %v1571
    %v1649 = vcombine.low %v1640, %v1642
    %v1651 = vunpack.c.l.s4 1983009808
    %v1652 = vunpack.c.0.s8 %v1651
    %v1653 = vlaneseq
    %v1654 = vshrl.u32 %v1653, 7
    %v1655 = vsub.s32 %v1652, %v1654
    %v1656 = vrot.slane %v1648, %v1655
    %v1658 = vunpack.c.l.s4 1983009808
    %v1659 = vunpack.c.0.s8 %v1658
    %v1660 = vlaneseq
    %v1661 = vshrl.u32 %v1660, 7
    %v1662 = vsub.s32 %v1659, %v1661
    %v1663 = vrot.slane %v1649, %v1662
    %v1664 = vcombine.low %v1656, %v1663
    %v1666 = vadd.f32 %v1501, %v1664
    %v1667 = vmul.f32 %v1666, 0.5
    %v1668 = vtanh.pop %v1667
    %v1669 = vmul.f32 %v1668, 0.5
    %v1670 = vadd.f32 %v1669, 0.5
    %v1672 = vrot.slane %v1666, 2
    %v1674 = vmul.f32 %v1672, 0.5
    %v1675 = vtanh.pop %v1674
    %v1676 = vmul.f32 %v1675, 0.5
    %v1677 = vadd.f32 %v1676, 0.5
    %v1678 = vrot.slane %v1666, 4
    %v1680 = vtanh.pop %v1678
    %v1681 = vrot.slane %v1666, 6
    %v1683 = vmul.f32 %v1681, 0.5
    %v1684 = vtanh.pop %v1683
    %v1685 = vmul.f32 %v1684, 0.5
    %v1686 = vadd.f32 %v1685, 0.5
    %v1687 = vmul.f32 %v1677, %v1499
    %v1688 = vmul.f32 %v1670, %v1680
    %v1689 = vadd.f32 %v1687, %v1688
    %v1690 = vtanh.pop %v1689
    %v1691 = vmul.f32 %v1686, %v1690
    %1692 = vst [vmem:[#allocation10] sm:$0x3] %v1689
    %1693 = vst [vmem:[#allocation8] sm:$0x3] %v1691
    %s1694 = scalar_lea.vmem [#allocation7], 14
    %1695 = vst [vmem:[%s1694] sm:$0x3] %v1691
    // Predicated region
    $region22: #{tpu_custom_call.1} parent=1 // pred_check
      _
    $region23: #{tpu_custom_call.1} parent=1 // pred_check_branch
      %1697 = sbr.rel (0) target = $region25
    $region24: #{tpu_custom_call.1} parent=1 // pred_region
      %s1699 = ssub.s32 256, 256
      %1700 = vsyncadd [#allocation4], %s1699
      %s1701 = sshll.u32 [#allocation7], 4
      %s1702 = int_to_ptr.vmem [resolvable:$true] %s1701
      %1707 = dma.vmem_to_hbm [thread:$0]  %s1702, 256, %s2, [#allocation4], 32, 32, 2
    $region25: #{tpu_custom_call.1} parent=1 // pred_fallthru
      _
    // Predicated region
    $region26: #{tpu_custom_call.1} parent=1 // pred_check
      _
    $region27: #{tpu_custom_call.1} parent=1 // pred_check_branch
      %1709 = sbr.rel (0) target = $region29
    $region28: #{tpu_custom_call.1} parent=1 // pred_region
      %s1711 = ssub.s32 32, 32
      %1712 = vsyncadd [#allocation9], %s1711
      %s1714 = sshll.u32 [#allocation8], 4
      %s1715 = int_to_ptr.vmem [resolvable:$true] %s1714
      %1717 = dma.vmem_to_hbm [thread:$0]  %s1715, 32, %s3, [#allocation9]
    $region29: #{tpu_custom_call.1} parent=1 // pred_fallthru
      _
    // Predicated region
    $region30: #{tpu_custom_call.1} parent=1 // pred_check
      _
    $region31: #{tpu_custom_call.1} parent=1 // pred_check_branch
      %1719 = sbr.rel (0) target = $region33
    $region32: #{tpu_custom_call.1} parent=1 // pred_region
      %s1721 = ssub.s32 32, 32
      %1722 = vsyncadd [#allocation9], %s1721
      %s1724 = sshll.u32 [#allocation10], 4
      %s1725 = int_to_ptr.vmem [resolvable:$true] %s1724
      %1727 = dma.vmem_to_hbm [thread:$0]  %s1725, 32, %s4, [#allocation9]
    $region33: #{tpu_custom_call.1} parent=1 // pred_fallthru
      _
    // Predicated region
    $region34: #{tpu_custom_call.1} parent=1 // pred_check
      _
    $region35: #{tpu_custom_call.1} parent=1 // pred_check_branch
      %1729 = sbr.rel (0) target = $region37
    $region36: #{tpu_custom_call.1} parent=1 // pred_region
      %1730 = dma.done [#allocation4], 256
    $region37: #{tpu_custom_call.1} parent=1 // pred_fallthru
      _
    // Predicated region
    $region38: #{tpu_custom_call.1} parent=1 // pred_check
      _
    $region39: #{tpu_custom_call.1} parent=1 // pred_check_branch
      %1732 = sbr.rel (0) target = $region41
    $region40: #{tpu_custom_call.1} parent=1 // pred_region
      %1733 = dma.done [#allocation9], 32
    $region41: #{tpu_custom_call.1} parent=1 // pred_fallthru
      _
    // Predicated region
    $region42: #{tpu_custom_call.1} parent=1 // pred_check
      _
    $region43: #{tpu_custom_call.1} parent=1 // pred_check_branch
      %1735 = sbr.rel (0) target = $region45
    $region44: #{tpu_custom_call.1} parent=1 // pred_region
      %1736 = dma.done [#allocation9], 32
    $region45: #{tpu_custom_call.1} parent=1 // pred_fallthru
      _
    %1737 = vsyncpa [#allocation3], 1
    %1738 = vsyncpa [#allocation6], 1
    %1739 = vsyncpa [#allocation4], 1
    %1740 = vsyncpa [#allocation9], 1

</llo_original>
